<compile_context>
chip_gen: v5e
topology: v5e:2x2
jax: 0.10.0
libtpu: 0.0.40
codegen_flags: <defaults>
</compile_context>

<pallas_src>
import numpy as np

import jax
import jax.numpy as jnp
from jax.experimental import pallas as pl
from jax.experimental.pallas import tpu as pltpu


# ----------------------------------------------------------------------------
# Host-side (trace-time) helpers
# ----------------------------------------------------------------------------
def _interp_coeffs_np(out_size: int, in_size: int):
    """align_corners=True bilinear source indices / fractions (host numpy)."""
    if out_size > 1:
        src = np.arange(out_size, dtype=np.float64) * (in_size - 1) / (out_size - 1)
    else:
        src = np.zeros((out_size,), dtype=np.float64)
    i0 = np.clip(np.floor(src), 0, in_size - 1).astype(np.int32)
    i1 = np.minimum(i0 + 1, in_size - 1).astype(np.int32)
    frac = (src - i0).astype(np.float32)
    return i0, i1, frac


def _interp_matrix_np(out_size: int, in_size: int) -> np.ndarray:
    """Row-stochastic bilinear matrix A (out_size, in_size), align_corners=True."""
    i0, i1, frac = _interp_coeffs_np(out_size, in_size)
    rows = np.arange(out_size)
    A = np.zeros((out_size, in_size), dtype=np.float32)
    np.add.at(A, (rows, i0), 1.0 - frac)
    np.add.at(A, (rows, i1), frac)
    return A


def _fold_bn(conv_bias, gamma, beta, run_mean, run_var, eps=1e-5):
    a = gamma / jnp.sqrt(run_var + eps)
    c = a * (conv_bias - run_mean) + beta
    return a, c


def _pick_tile_rows(H, W, Cin, Cout, Wy, budget_bytes=8 << 20):
    """Output rows per grid step.

    Prefers lane-dense blocks (TH*W multiple of 128), keeps >=2 grid steps
    along H (v7x: 2 TensorCores / chip) and bounds the per-step streamed VMEM
    so the kernel fits every generation (v7x only has 64 MiB physical VMEM).
    """
    def fits(th):
        stream = 2 * 4 * th * W * (Cin + Cout)        # x + out blocks, double buffered, f32
        bdiag = 4 * (th * Wy) * (th * W)              # resident block-diag W-interp matrix
        return stream + bdiag <= budget_bytes

    divisors = [th for th in range(1, H + 1) if H % th == 0]
    for need_two_steps in (True, False):
        cands = [th for th in divisors
                 if (th * W) % 128 == 0 and fits(th)
                 and (H // th >= 2 or not need_two_steps)]
        if cands:
            return max(cands)
    # Fallback: whole image per step (block dims == full array dims is always a
    # legal TPU block shape even when W is not a multiple of 128).
    return H


# ----------------------------------------------------------------------------
# Kernel
# ----------------------------------------------------------------------------
def _make_kernel(TH: int, W: int, Wy: int):
    def kernel(i0_s, i1_s,                           # scalar prefetch (SMEM int32[H])
               x_ref, y_ref, fr_ref,
               w1_ref, c1_ref, w2_ref, c2_ref, bd_ref,
               o_ref, yh_ref):
        # x_ref : (Cin,  TH*W)   flattened spatial slab of the low-level feature
        # y_ref : (Cout, Hy, Wy) high-level feature, resident per batch element
        # fr_ref: (H,)   f32 SMEM, per-output-row H-interp fraction
        # w1_ref: (Cin,  Cin)  bf16, BN1 scale folded into the conv weight
        # c1_ref: (Cin,  1)    f32 folded BN1 shift (conv bias included)
        # w2_ref: (Cout, Cin)  bf16, BN2 scale folded into the conv weight
        # c2_ref: (Cout, 1)    f32 folded BN2 shift
        # bd_ref: (TH*Wy, TH*W) f32 kron(I_TH, A_w^T): width-direction interp
        # o_ref : (Cout, TH*W)
        # yh_ref: (Cout, TH*Wy) f32 scratch (H-interped rows, packed per step)
        hb = pl.program_id(1)
        h0 = hb * TH

        # --- conv path: two folded-BN 1x1 convs on the whole slab
        #     (bf16 MXU matmuls, f32 accumulation, f32 shift + ReLU on the VPU).
        x = x_ref[...].astype(jnp.bfloat16)
        h1 = jnp.dot(w1_ref[...], x, preferred_element_type=jnp.float32)
        h1 = jnp.maximum(h1 + c1_ref[...], 0.0)                     # (Cin,  TH*W)
        h2 = jnp.dot(w2_ref[...], h1.astype(jnp.bfloat16),
                     preferred_element_type=jnp.float32)
        h2 = jnp.maximum(h2 + c2_ref[...], 0.0)                     # (Cout, TH*W)

        # --- separable bilinear upsample of y, all in f32.
        # H direction: gather the two source rows for each of the TH output
        # rows from the resident y block and lerp on the VPU; pack into scratch.
        for r in range(TH):                                         # TH is static
            h = h0 + r
            idx0 = i0_s[h]
            idx1 = i1_s[h]
            t = fr_ref[h]                                           # f32 scalar (SMEM)
            row0 = y_ref[:, pl.ds(idx0, 1), :]                      # (Cout, 1, Wy)
            row1 = y_ref[:, pl.ds(idx1, 1), :]
            row = row0 + t * (row1 - row0)
            yh_ref[:, r * Wy:(r + 1) * Wy] = row[:, 0, :]
        # W direction: one block-diagonal matmul -> (Cout, TH*W), already in the
        # flattened row-major (h, w) layout of the output block.
        yu = jnp.dot(yh_ref[...], bd_ref[...],
                     preferred_element_type=jnp.float32)

        o_ref[...] = (yu + h2).astype(o_ref.dtype)

    return kernel


# ----------------------------------------------------------------------------
# Wrapper
# ----------------------------------------------------------------------------
@jax.jit
def upsample_forward(x, y, params):
    """x: (N, Cin, H, W) low-level feature; y: (N, Cout, Hy, Wy) high-level feature."""
    N, Cin, H, W = x.shape
    Ny, Cout, Hy, Wy = y.shape
    assert Ny == N

    TH = _pick_tile_rows(H, W, Cin, Cout, Wy)
    TS = TH * W
    S = H * W

    # Host-side interpolation tables (no dense Kronecker over the full image).
    i0_np, i1_np, fr_np = _interp_coeffs_np(H, Hy)          # H-direction taps
    awt_np = _interp_matrix_np(W, Wy).T                     # (Wy, W), W-direction
    bd_np = np.kron(np.eye(TH, dtype=np.float32), awt_np)   # (TH*Wy, TH*W)

    i0 = jnp.asarray(i0_np, jnp.int32)
    i1 = jnp.asarray(i1_np, jnp.int32)
    fr = jnp.asarray(fr_np, jnp.float32)                    # (H,) -> SMEM
    bd = jnp.asarray(bd_np, jnp.float32)                    # interp path stays f32

    # Fold eval-mode BN into the 1x1 conv weights (scale) and a shift vector.
    a1, s1 = _fold_bn(params["b1"], params["g1"], params["bt1"],
                      params["rm1"], params["rv1"])
    a2, s2 = _fold_bn(params["b2"], params["g2"], params["bt2"],
                      params["rm2"], params["rv2"])
    w1s = (a1[:, None] * params["w1"]).astype(jnp.bfloat16)     # (Cin,  Cin)
    w2s = (a2[:, None] * params["w2"]).astype(jnp.bfloat16)     # (Cout, Cin)
    c1v = s1.reshape(Cin, 1).astype(jnp.float32)
    c2v = s2.reshape(Cout, 1).astype(jnp.float32)

    # Free (bitcast) reshape: flattened spatial axis -> lane-dense blocks.
    x2 = x.reshape(N, Cin, S)

    kernel = _make_kernel(TH, W, Wy)

    out = pl.pallas_call(
        kernel,
        out_shape=jax.ShapeDtypeStruct((N, Cout, S), x.dtype),
        grid_spec=pltpu.PrefetchScalarGridSpec(
            num_scalar_prefetch=2,            # i0, i1 -> SMEM, read in-kernel
            grid=(N, H // TH),
            in_specs=[
                # low-level feature: TH rows, flattened -> (Cin, TH*W)
                pl.BlockSpec((None, Cin, TS),
                             lambda n, hb, i0r, i1r: (n, 0, hb)),
                # high-level feature: resident per batch element
                pl.BlockSpec((None, Cout, Hy, Wy),
                             lambda n, hb, i0r, i1r: (n, 0, 0, 0)),
                # per-row H-interp fraction: SMEM scalars
                pl.BlockSpec(memory_space=pltpu.MemorySpace.SMEM),
                # weights / shifts / block-diag W-interp matrix (resident)
                pl.BlockSpec((Cin, Cin), lambda n, hb, i0r, i1r: (0, 0)),
                pl.BlockSpec((Cin, 1), lambda n, hb, i0r, i1r: (0, 0)),
                pl.BlockSpec((Cout, Cin), lambda n, hb, i0r, i1r: (0, 0)),
                pl.BlockSpec((Cout, 1), lambda n, hb, i0r, i1r: (0, 0)),
                pl.BlockSpec((TH * Wy, TS), lambda n, hb, i0r, i1r: (0, 0)),
            ],
            out_specs=pl.BlockSpec((None, Cout, TS),
                                   lambda n, hb, i0r, i1r: (n, 0, hb)),
            scratch_shapes=[pltpu.VMEM((Cout, TH * Wy), jnp.float32)],
        ),
        compiler_params=pltpu.CompilerParams(
            dimension_semantics=("parallel", "parallel"),
            # Streamed per-step footprint is bounded to <= 8 MiB by the TH
            # picker; 32 MiB scoped VMEM is safe on v5e/v6e (128 MiB) and
            # leaves headroom on v7x (64 MiB physical).
            vmem_limit_bytes=32 * 1024 * 1024,
        ),
    )(i0, i1, x2, y, fr, w1s, c1v, w2s, c2v, bd)

    return out.reshape(N, Cout, H, W)


# ----------------------------------------------------------------------------
# Pure-JAX reference and test harness
# ----------------------------------------------------------------------------
def reference_forward(x, y, params):
    """Pure-JAX reference (same eval-mode semantics)."""
    N, Cin, H, W = x.shape
    _, Cout, Hy, Wy = y.shape
    eps = 1e-5

    def cbr(z, w, b, g, bt, rm, rv):
        z = jnp.einsum("oc,nchw->nohw", w, z) + b[None, :, None, None]
        z = g[None, :, None, None] * (z - rm[None, :, None, None]) \
            / jnp.sqrt(rv[None, :, None, None] + eps) + bt[None, :, None, None]
        return jnp.maximum(z, 0.0)

    h = cbr(x, params["w1"], params["b1"], params["g1"], params["bt1"],
            params["rm1"], params["rv1"])
    h = cbr(h, params["w2"], params["b2"], params["g2"], params["bt2"],
            params["rm2"], params["rv2"])

    A_h = jnp.asarray(_interp_matrix_np(H, Hy))
    A_w = jnp.asarray(_interp_matrix_np(W, Wy))
    y_up = jnp.einsum("hH,ncHW,wW->nchw", A_h, y, A_w)
    return y_up + h


def make_params(key, in_channels, out_channels):
    ks = jax.random.split(key, 8)
    return {
        # ConvBnRelu #1: Conv2d(Cin, Cin, 1) + BN(Cin)
        "w1":  0.3 * jax.random.normal(ks[0], (in_channels, in_channels), jnp.float32),
        "b1":  0.1 * jax.random.normal(ks[1], (in_channels,), jnp.float32),
        "g1":  1.0 + 0.1 * jax.random.normal(ks[2], (in_channels,), jnp.float32),
        "bt1": 0.05 * jax.random.normal(ks[3], (in_channels,), jnp.float32),
        "rm1": 0.1 * jax.random.normal(ks[4], (in_channels,), jnp.float32),
        "rv1": 1.0 + 0.1 * jax.random.uniform(ks[5], (in_channels,), jnp.float32),
        # ConvBnRelu #2: Conv2d(Cin, Cout, 1) + BN(Cout)
        "w2":  0.3 * jax.random.normal(ks[6], (out_channels, in_channels), jnp.float32),
        "b2":  0.1 * jax.random.normal(ks[7], (out_channels,), jnp.float32),
        "g2":  jnp.linspace(0.9, 1.1, out_channels, dtype=jnp.float32),
        "bt2": jnp.linspace(-0.05, 0.05, out_channels, dtype=jnp.float32),
        "rm2": jnp.linspace(-0.1, 0.1, out_channels, dtype=jnp.float32),
        "rv2": jnp.linspace(0.9, 1.2, out_channels, dtype=jnp.float32),
    }


if __name__ == "__main__":
    N, Cin, Cout = 2, 4, 8
    H, W = 16, 16          # low-level feature spatial size (target size)
    Hy, Wy = 8, 8          # high-level feature spatial size (to be upsampled)

    key = jax.random.PRNGKey(0)
    kx, ky, kp = jax.random.split(key, 3)
    x = jax.random.normal(kx, (N, Cin, H, W), jnp.float32)
    y = jax.random.normal(ky, (N, Cout, Hy, Wy), jnp.float32)
    params = make_params(kp, Cin, Cout)

    out = jax.block_until_ready(upsample_forward(x, y, params))
    ref = reference_forward(x, y, params)

    assert out.shape == (N, Cout, H, W)
    max_err = float(jnp.max(jnp.abs(out - ref)))
    # conv path uses bf16 matmul operands (f32 accumulation); the bilinear
    # interpolation path is full f32.
    assert max_err < 5e-2, f"max abs err = {max_err}"

    print("KERNEL_OK")
</pallas_src>

<mosaic_0001>
module attributes {stable_mosaic.version = 11 : i64} {
  func.func @kernel(%arg0: i32, %arg1: i32, %arg2: memref<16xi32, #tpu.memory_space<smem>>, %arg3: memref<16xi32, #tpu.memory_space<smem>>, %arg4: memref<1x4x128xf32, #tpu.memory_space<vmem>>, %arg5: memref<1x8x8x8xf32, #tpu.memory_space<vmem>>, %arg6: memref<16xf32, #tpu.memory_space<smem>>, %arg7: memref<4x4xbf16, #tpu.memory_space<vmem>>, %arg8: memref<4x1xf32, #tpu.memory_space<vmem>>, %arg9: memref<8x4xbf16, #tpu.memory_space<vmem>>, %arg10: memref<8x1xf32, #tpu.memory_space<vmem>>, %arg11: memref<64x128xf32, #tpu.memory_space<vmem>>, %arg12: memref<1x8x128xf32, #tpu.memory_space<vmem>>, %arg13: memref<8x64xf32, #tpu.memory_space<vmem>>) attributes {dimension_semantics = [#tpu.dimension_semantics<parallel>, #tpu.dimension_semantics<parallel>], iteration_bounds = array<i64: 2, 2>, scalar_prefetch = 2 : i64, scratch_operands = 1 : i64, tpu.core_type = #tpu.core_type<tc>, window_params = [{transform_indices = @transform_0, window_bounds = array<i64: 1, 4, 128>}, {transform_indices = @transform_1, window_bounds = array<i64: 1, 8, 8, 8>}, {transform_indices = @transform_2, window_bounds = array<i64: 16>}, {pipeline_mode = #tpu.pipeline_mode<synchronous>, transform_indices = @transform_3, window_bounds = array<i64: 4, 4>}, {pipeline_mode = #tpu.pipeline_mode<synchronous>, transform_indices = @transform_4, window_bounds = array<i64: 4, 1>}, {pipeline_mode = #tpu.pipeline_mode<synchronous>, transform_indices = @transform_5, window_bounds = array<i64: 8, 4>}, {pipeline_mode = #tpu.pipeline_mode<synchronous>, transform_indices = @transform_6, window_bounds = array<i64: 8, 1>}, {pipeline_mode = #tpu.pipeline_mode<synchronous>, transform_indices = @transform_7, window_bounds = array<i64: 64, 128>}, {transform_indices = @transform_8, window_bounds = array<i64: 1, 8, 128>}]} {
    %c8_i32 = arith.constant 8 : i32
    %0 = arith.muli %arg1, %c8_i32 : i32
    %c0 = arith.constant 0 : index
    %c0_0 = arith.constant 0 : index
    %c0_1 = arith.constant 0 : index
    %1 = vector.load %arg4[%c0, %c0_0, %c0_1] : memref<1x4x128xf32, #tpu.memory_space<vmem>>, vector<1x4x128xf32>
    %2 = vector.shape_cast %1 : vector<1x4x128xf32> to vector<4x128xf32>
    %3 = arith.truncf %2 : vector<4x128xf32> to vector<4x128xbf16>
    %c0_2 = arith.constant 0 : index
    %c0_3 = arith.constant 0 : index
    %4 = vector.load %arg7[%c0_2, %c0_3] : memref<4x4xbf16, #tpu.memory_space<vmem>>, vector<4x4xbf16>
    %cst = arith.constant dense<0.000000e+00> : vector<4x128xf32>
    %5 = tpu.matmul %4, %3, %cst {dimension_numbers = #tpu.dot_dimension_numbers<[1], [0], [0], [1], [0, 0, 1, 1], [], []>} : vector<4x4xbf16>, vector<4x128xbf16>, vector<4x128xf32> -> vector<4x128xf32>
    %c0_4 = arith.constant 0 : index
    %c0_5 = arith.constant 0 : index
    %6 = vector.load %arg8[%c0_4, %c0_5] : memref<4x1xf32, #tpu.memory_space<vmem>>, vector<4x1xf32>
    %7 = vector.broadcast %6 : vector<4x1xf32> to vector<4x128xf32>
    %8 = arith.addf %5, %7 : vector<4x128xf32>
    %cst_6 = arith.constant 0.000000e+00 : f32
    %9 = vector.broadcast %cst_6 : f32 to vector<4x128xf32>
    %10 = arith.maximumf %8, %9 : vector<4x128xf32>
    %c0_7 = arith.constant 0 : index
    %c0_8 = arith.constant 0 : index
    %11 = vector.load %arg9[%c0_7, %c0_8] : memref<8x4xbf16, #tpu.memory_space<vmem>>, vector<8x4xbf16>
    %12 = arith.truncf %10 : vector<4x128xf32> to vector<4x128xbf16>
    %cst_9 = arith.constant dense<0.000000e+00> : vector<8x128xf32>
    %13 = tpu.matmul %11, %12, %cst_9 {dimension_numbers = #tpu.dot_dimension_numbers<[1], [0], [0], [1], [0, 0, 1, 1], [], []>} : vector<8x4xbf16>, vector<4x128xbf16>, vector<8x128xf32> -> vector<8x128xf32>
    %c0_10 = arith.constant 0 : index
    %c0_11 = arith.constant 0 : index
    %14 = vector.load %arg10[%c0_10, %c0_11] : memref<8x1xf32, #tpu.memory_space<vmem>>, vector<8x1xf32>
    %15 = vector.broadcast %14 : vector<8x1xf32> to vector<8x128xf32>
    %16 = arith.addf %13, %15 : vector<8x128xf32>
    %cst_12 = arith.constant 0.000000e+00 : f32
    %17 = vector.broadcast %cst_12 : f32 to vector<8x128xf32>
    %18 = arith.maximumf %16, %17 : vector<8x128xf32>
    %c0_i32 = arith.constant 0 : i32
    %19 = arith.addi %0, %c0_i32 : i32
    %20 = arith.index_cast %19 : i32 to index
    %21 = memref.load %arg2[%20] : memref<16xi32, #tpu.memory_space<smem>>
    %22 = arith.index_cast %19 : i32 to index
    %23 = memref.load %arg3[%22] : memref<16xi32, #tpu.memory_space<smem>>
    %24 = arith.index_cast %19 : i32 to index
    %25 = memref.load %arg6[%24] : memref<16xf32, #tpu.memory_space<smem>>
    %c0_13 = arith.constant 0 : index
    %c0_14 = arith.constant 0 : index
    %26 = arith.index_cast %21 : i32 to index
    %c0_15 = arith.constant 0 : index
    %27 = vector.load %arg5[%c0_13, %c0_14, %26, %c0_15] : memref<1x8x8x8xf32, #tpu.memory_space<vmem>>, vector<1x8x1x8xf32>
    %28 = vector.shape_cast %27 : vector<1x8x1x8xf32> to vector<8x1x8xf32>
    %c0_16 = arith.constant 0 : index
    %c0_17 = arith.constant 0 : index
    %29 = arith.index_cast %23 : i32 to index
    %c0_18 = arith.constant 0 : index
    %30 = vector.load %arg5[%c0_16, %c0_17, %29, %c0_18] : memref<1x8x8x8xf32, #tpu.memory_space<vmem>>, vector<1x8x1x8xf32>
    %31 = vector.shape_cast %30 : vector<1x8x1x8xf32> to vector<8x1x8xf32>
    %32 = arith.subf %31, %28 : vector<8x1x8xf32>
    %33 = vector.broadcast %25 : f32 to vector<8x1x8xf32>
    %34 = arith.mulf %33, %32 : vector<8x1x8xf32>
    %35 = arith.addf %28, %34 : vector<8x1x8xf32>
    %36 = vector.shape_cast %35 : vector<8x1x8xf32> to vector<8x8xf32>
    %c0_19 = arith.constant 0 : index
    %c0_20 = arith.constant 0 : index
    %37 = vector.load %arg13[%c0_19, %c0_20] : memref<8x64xf32, #tpu.memory_space<vmem>>, vector<8x8xf32>
    tpu.vector_store %arg13[%c0_19, %c0_20], %36 {strides = array<i32>} : memref<8x64xf32, #tpu.memory_space<vmem>>, vector<8x8xf32>,
    %c1_i32 = arith.constant 1 : i32
    %38 = arith.addi %0, %c1_i32 : i32
    %39 = arith.index_cast %38 : i32 to index
    %40 = memref.load %arg2[%39] : memref<16xi32, #tpu.memory_space<smem>>
    %41 = arith.index_cast %38 : i32 to index
    %42 = memref.load %arg3[%41] : memref<16xi32, #tpu.memory_space<smem>>
    %43 = arith.index_cast %38 : i32 to index
    %44 = memref.load %arg6[%43] : memref<16xf32, #tpu.memory_space<smem>>
    %c0_21 = arith.constant 0 : index
    %c0_22 = arith.constant 0 : index
    %45 = arith.index_cast %40 : i32 to index
    %c0_23 = arith.constant 0 : index
    %46 = vector.load %arg5[%c0_21, %c0_22, %45, %c0_23] : memref<1x8x8x8xf32, #tpu.memory_space<vmem>>, vector<1x8x1x8xf32>
    %47 = vector.shape_cast %46 : vector<1x8x1x8xf32> to vector<8x1x8xf32>
    %c0_24 = arith.constant 0 : index
    %c0_25 = arith.constant 0 : index
    %48 = arith.index_cast %42 : i32 to index
    %c0_26 = arith.constant 0 : index
    %49 = vector.load %arg5[%c0_24, %c0_25, %48, %c0_26] : memref<1x8x8x8xf32, #tpu.memory_space<vmem>>, vector<1x8x1x8xf32>
    %50 = vector.shape_cast %49 : vector<1x8x1x8xf32> to vector<8x1x8xf32>
    %51 = arith.subf %50, %47 : vector<8x1x8xf32>
    %52 = vector.broadcast %44 : f32 to vector<8x1x8xf32>
    %53 = arith.mulf %52, %51 : vector<8x1x8xf32>
    %54 = arith.addf %47, %53 : vector<8x1x8xf32>
    %55 = vector.shape_cast %54 : vector<8x1x8xf32> to vector<8x8xf32>
    %c0_27 = arith.constant 0 : index
    %c8 = arith.constant 8 : index
    %56 = vector.load %arg13[%c0_27, %c8] : memref<8x64xf32, #tpu.memory_space<vmem>>, vector<8x8xf32>
    tpu.vector_store %arg13[%c0_27, %c8], %55 {strides = array<i32>} : memref<8x64xf32, #tpu.memory_space<vmem>>, vector<8x8xf32>,
    %c2_i32 = arith.constant 2 : i32
    %57 = arith.addi %0, %c2_i32 : i32
    %58 = arith.index_cast %57 : i32 to index
    %59 = memref.load %arg2[%58] : memref<16xi32, #tpu.memory_space<smem>>
    %60 = arith.index_cast %57 : i32 to index
    %61 = memref.load %arg3[%60] : memref<16xi32, #tpu.memory_space<smem>>
    %62 = arith.index_cast %57 : i32 to index
    %63 = memref.load %arg6[%62] : memref<16xf32, #tpu.memory_space<smem>>
    %c0_28 = arith.constant 0 : index
    %c0_29 = arith.constant 0 : index
    %64 = arith.index_cast %59 : i32 to index
    %c0_30 = arith.constant 0 : index
    %65 = vector.load %arg5[%c0_28, %c0_29, %64, %c0_30] : memref<1x8x8x8xf32, #tpu.memory_space<vmem>>, vector<1x8x1x8xf32>
    %66 = vector.shape_cast %65 : vector<1x8x1x8xf32> to vector<8x1x8xf32>
    %c0_31 = arith.constant 0 : index
    %c0_32 = arith.constant 0 : index
    %67 = arith.index_cast %61 : i32 to index
    %c0_33 = arith.constant 0 : index
    %68 = vector.load %arg5[%c0_31, %c0_32, %67, %c0_33] : memref<1x8x8x8xf32, #tpu.memory_space<vmem>>, vector<1x8x1x8xf32>
    %69 = vector.shape_cast %68 : vector<1x8x1x8xf32> to vector<8x1x8xf32>
    %70 = arith.subf %69, %66 : vector<8x1x8xf32>
    %71 = vector.broadcast %63 : f32 to vector<8x1x8xf32>
    %72 = arith.mulf %71, %70 : vector<8x1x8xf32>
    %73 = arith.addf %66, %72 : vector<8x1x8xf32>
    %74 = vector.shape_cast %73 : vector<8x1x8xf32> to vector<8x8xf32>
    %c0_34 = arith.constant 0 : index
    %c16 = arith.constant 16 : index
    %75 = vector.load %arg13[%c0_34, %c16] : memref<8x64xf32, #tpu.memory_space<vmem>>, vector<8x8xf32>
    tpu.vector_store %arg13[%c0_34, %c16], %74 {strides = array<i32>} : memref<8x64xf32, #tpu.memory_space<vmem>>, vector<8x8xf32>,
    %c3_i32 = arith.constant 3 : i32
    %76 = arith.addi %0, %c3_i32 : i32
    %77 = arith.index_cast %76 : i32 to index
    %78 = memref.load %arg2[%77] : memref<16xi32, #tpu.memory_space<smem>>
    %79 = arith.index_cast %76 : i32 to index
    %80 = memref.load %arg3[%79] : memref<16xi32, #tpu.memory_space<smem>>
    %81 = arith.index_cast %76 : i32 to index
    %82 = memref.load %arg6[%81] : memref<16xf32, #tpu.memory_space<smem>>
    %c0_35 = arith.constant 0 : index
    %c0_36 = arith.constant 0 : index
    %83 = arith.index_cast %78 : i32 to index
    %c0_37 = arith.constant 0 : index
    %84 = vector.load %arg5[%c0_35, %c0_36, %83, %c0_37] : memref<1x8x8x8xf32, #tpu.memory_space<vmem>>, vector<1x8x1x8xf32>
    %85 = vector.shape_cast %84 : vector<1x8x1x8xf32> to vector<8x1x8xf32>
    %c0_38 = arith.constant 0 : index
    %c0_39 = arith.constant 0 : index
    %86 = arith.index_cast %80 : i32 to index
    %c0_40 = arith.constant 0 : index
    %87 = vector.load %arg5[%c0_38, %c0_39, %86, %c0_40] : memref<1x8x8x8xf32, #tpu.memory_space<vmem>>, vector<1x8x1x8xf32>
    %88 = vector.shape_cast %87 : vector<1x8x1x8xf32> to vector<8x1x8xf32>
    %89 = arith.subf %88, %85 : vector<8x1x8xf32>
    %90 = vector.broadcast %82 : f32 to vector<8x1x8xf32>
    %91 = arith.mulf %90, %89 : vector<8x1x8xf32>
    %92 = arith.addf %85, %91 : vector<8x1x8xf32>
    %93 = vector.shape_cast %92 : vector<8x1x8xf32> to vector<8x8xf32>
    %c0_41 = arith.constant 0 : index
    %c24 = arith.constant 24 : index
    %94 = vector.load %arg13[%c0_41, %c24] : memref<8x64xf32, #tpu.memory_space<vmem>>, vector<8x8xf32>
    tpu.vector_store %arg13[%c0_41, %c24], %93 {strides = array<i32>} : memref<8x64xf32, #tpu.memory_space<vmem>>, vector<8x8xf32>,
    %c4_i32 = arith.constant 4 : i32
    %95 = arith.addi %0, %c4_i32 : i32
    %96 = arith.index_cast %95 : i32 to index
    %97 = memref.load %arg2[%96] : memref<16xi32, #tpu.memory_space<smem>>
    %98 = arith.index_cast %95 : i32 to index
    %99 = memref.load %arg3[%98] : memref<16xi32, #tpu.memory_space<smem>>
    %100 = arith.index_cast %95 : i32 to index
    %101 = memref.load %arg6[%100] : memref<16xf32, #tpu.memory_space<smem>>
    %c0_42 = arith.constant 0 : index
    %c0_43 = arith.constant 0 : index
    %102 = arith.index_cast %97 : i32 to index
    %c0_44 = arith.constant 0 : index
    %103 = vector.load %arg5[%c0_42, %c0_43, %102, %c0_44] : memref<1x8x8x8xf32, #tpu.memory_space<vmem>>, vector<1x8x1x8xf32>
    %104 = vector.shape_cast %103 : vector<1x8x1x8xf32> to vector<8x1x8xf32>
    %c0_45 = arith.constant 0 : index
    %c0_46 = arith.constant 0 : index
    %105 = arith.index_cast %99 : i32 to index
    %c0_47 = arith.constant 0 : index
    %106 = vector.load %arg5[%c0_45, %c0_46, %105, %c0_47] : memref<1x8x8x8xf32, #tpu.memory_space<vmem>>, vector<1x8x1x8xf32>
    %107 = vector.shape_cast %106 : vector<1x8x1x8xf32> to vector<8x1x8xf32>
    %108 = arith.subf %107, %104 : vector<8x1x8xf32>
    %109 = vector.broadcast %101 : f32 to vector<8x1x8xf32>
    %110 = arith.mulf %109, %108 : vector<8x1x8xf32>
    %111 = arith.addf %104, %110 : vector<8x1x8xf32>
    %112 = vector.shape_cast %111 : vector<8x1x8xf32> to vector<8x8xf32>
    %c0_48 = arith.constant 0 : index
    %c32 = arith.constant 32 : index
    %113 = vector.load %arg13[%c0_48, %c32] : memref<8x64xf32, #tpu.memory_space<vmem>>, vector<8x8xf32>
    tpu.vector_store %arg13[%c0_48, %c32], %112 {strides = array<i32>} : memref<8x64xf32, #tpu.memory_space<vmem>>, vector<8x8xf32>,
    %c5_i32 = arith.constant 5 : i32
    %114 = arith.addi %0, %c5_i32 : i32
    %115 = arith.index_cast %114 : i32 to index
    %116 = memref.load %arg2[%115] : memref<16xi32, #tpu.memory_space<smem>>
    %117 = arith.index_cast %114 : i32 to index
    %118 = memref.load %arg3[%117] : memref<16xi32, #tpu.memory_space<smem>>
    %119 = arith.index_cast %114 : i32 to index
    %120 = memref.load %arg6[%119] : memref<16xf32, #tpu.memory_space<smem>>
    %c0_49 = arith.constant 0 : index
    %c0_50 = arith.constant 0 : index
    %121 = arith.index_cast %116 : i32 to index
    %c0_51 = arith.constant 0 : index
    %122 = vector.load %arg5[%c0_49, %c0_50, %121, %c0_51] : memref<1x8x8x8xf32, #tpu.memory_space<vmem>>, vector<1x8x1x8xf32>
    %123 = vector.shape_cast %122 : vector<1x8x1x8xf32> to vector<8x1x8xf32>
    %c0_52 = arith.constant 0 : index
    %c0_53 = arith.constant 0 : index
    %124 = arith.index_cast %118 : i32 to index
    %c0_54 = arith.constant 0 : index
    %125 = vector.load %arg5[%c0_52, %c0_53, %124, %c0_54] : memref<1x8x8x8xf32, #tpu.memory_space<vmem>>, vector<1x8x1x8xf32>
    %126 = vector.shape_cast %125 : vector<1x8x1x8xf32> to vector<8x1x8xf32>
    %127 = arith.subf %126, %123 : vector<8x1x8xf32>
    %128 = vector.broadcast %120 : f32 to vector<8x1x8xf32>
    %129 = arith.mulf %128, %127 : vector<8x1x8xf32>
    %130 = arith.addf %123, %129 : vector<8x1x8xf32>
    %131 = vector.shape_cast %130 : vector<8x1x8xf32> to vector<8x8xf32>
    %c0_55 = arith.constant 0 : index
    %c40 = arith.constant 40 : index
    %132 = vector.load %arg13[%c0_55, %c40] : memref<8x64xf32, #tpu.memory_space<vmem>>, vector<8x8xf32>
    tpu.vector_store %arg13[%c0_55, %c40], %131 {strides = array<i32>} : memref<8x64xf32, #tpu.memory_space<vmem>>, vector<8x8xf32>,
    %c6_i32 = arith.constant 6 : i32
    %133 = arith.addi %0, %c6_i32 : i32
    %134 = arith.index_cast %133 : i32 to index
    %135 = memref.load %arg2[%134] : memref<16xi32, #tpu.memory_space<smem>>
    %136 = arith.index_cast %133 : i32 to index
    %137 = memref.load %arg3[%136] : memref<16xi32, #tpu.memory_space<smem>>
    %138 = arith.index_cast %133 : i32 to index
    %139 = memref.load %arg6[%138] : memref<16xf32, #tpu.memory_space<smem>>
    %c0_56 = arith.constant 0 : index
    %c0_57 = arith.constant 0 : index
    %140 = arith.index_cast %135 : i32 to index
    %c0_58 = arith.constant 0 : index
    %141 = vector.load %arg5[%c0_56, %c0_57, %140, %c0_58] : memref<1x8x8x8xf32, #tpu.memory_space<vmem>>, vector<1x8x1x8xf32>
    %142 = vector.shape_cast %141 : vector<1x8x1x8xf32> to vector<8x1x8xf32>
    %c0_59 = arith.constant 0 : index
    %c0_60 = arith.constant 0 : index
    %143 = arith.index_cast %137 : i32 to index
    %c0_61 = arith.constant 0 : index
    %144 = vector.load %arg5[%c0_59, %c0_60, %143, %c0_61] : memref<1x8x8x8xf32, #tpu.memory_space<vmem>>, vector<1x8x1x8xf32>
    %145 = vector.shape_cast %144 : vector<1x8x1x8xf32> to vector<8x1x8xf32>
    %146 = arith.subf %145, %142 : vector<8x1x8xf32>
    %147 = vector.broadcast %139 : f32 to vector<8x1x8xf32>
    %148 = arith.mulf %147, %146 : vector<8x1x8xf32>
    %149 = arith.addf %142, %148 : vector<8x1x8xf32>
    %150 = vector.shape_cast %149 : vector<8x1x8xf32> to vector<8x8xf32>
    %c0_62 = arith.constant 0 : index
    %c48 = arith.constant 48 : index
    %151 = vector.load %arg13[%c0_62, %c48] : memref<8x64xf32, #tpu.memory_space<vmem>>, vector<8x8xf32>
    tpu.vector_store %arg13[%c0_62, %c48], %150 {strides = array<i32>} : memref<8x64xf32, #tpu.memory_space<vmem>>, vector<8x8xf32>,
    %c7_i32 = arith.constant 7 : i32
    %152 = arith.addi %0, %c7_i32 : i32
    %153 = arith.index_cast %152 : i32 to index
    %154 = memref.load %arg2[%153] : memref<16xi32, #tpu.memory_space<smem>>
    %155 = arith.index_cast %152 : i32 to index
    %156 = memref.load %arg3[%155] : memref<16xi32, #tpu.memory_space<smem>>
    %157 = arith.index_cast %152 : i32 to index
    %158 = memref.load %arg6[%157] : memref<16xf32, #tpu.memory_space<smem>>
    %c0_63 = arith.constant 0 : index
    %c0_64 = arith.constant 0 : index
    %159 = arith.index_cast %154 : i32 to index
    %c0_65 = arith.constant 0 : index
    %160 = vector.load %arg5[%c0_63, %c0_64, %159, %c0_65] : memref<1x8x8x8xf32, #tpu.memory_space<vmem>>, vector<1x8x1x8xf32>
    %161 = vector.shape_cast %160 : vector<1x8x1x8xf32> to vector<8x1x8xf32>
    %c0_66 = arith.constant 0 : index
    %c0_67 = arith.constant 0 : index
    %162 = arith.index_cast %156 : i32 to index
    %c0_68 = arith.constant 0 : index
    %163 = vector.load %arg5[%c0_66, %c0_67, %162, %c0_68] : memref<1x8x8x8xf32, #tpu.memory_space<vmem>>, vector<1x8x1x8xf32>
    %164 = vector.shape_cast %163 : vector<1x8x1x8xf32> to vector<8x1x8xf32>
    %165 = arith.subf %164, %161 : vector<8x1x8xf32>
    %166 = vector.broadcast %158 : f32 to vector<8x1x8xf32>
    %167 = arith.mulf %166, %165 : vector<8x1x8xf32>
    %168 = arith.addf %161, %167 : vector<8x1x8xf32>
    %169 = vector.shape_cast %168 : vector<8x1x8xf32> to vector<8x8xf32>
    %c0_69 = arith.constant 0 : index
    %c56 = arith.constant 56 : index
    %170 = vector.load %arg13[%c0_69, %c56] : memref<8x64xf32, #tpu.memory_space<vmem>>, vector<8x8xf32>
    tpu.vector_store %arg13[%c0_69, %c56], %169 {strides = array<i32>} : memref<8x64xf32, #tpu.memory_space<vmem>>, vector<8x8xf32>,
    %c0_70 = arith.constant 0 : index
    %c0_71 = arith.constant 0 : index
    %171 = vector.load %arg13[%c0_70, %c0_71] : memref<8x64xf32, #tpu.memory_space<vmem>>, vector<8x64xf32>
    %c0_72 = arith.constant 0 : index
    %c0_73 = arith.constant 0 : index
    %172 = vector.load %arg11[%c0_72, %c0_73] : memref<64x128xf32, #tpu.memory_space<vmem>>, vector<64x128xf32>
    %cst_74 = arith.constant dense<0.000000e+00> : vector<8x128xf32>
    %173 = tpu.matmul %171, %172, %cst_74 {dimension_numbers = #tpu.dot_dimension_numbers<[1], [0], [0], [1], [0, 0, 1, 1], [], []>} : vector<8x64xf32>, vector<64x128xf32>, vector<8x128xf32> -> vector<8x128xf32>
    %174 = arith.addf %173, %18 : vector<8x128xf32>
    %c0_75 = arith.constant 0 : index
    %c0_76 = arith.constant 0 : index
    %c0_77 = arith.constant 0 : index
    %175 = vector.load %arg12[%c0_75, %c0_76, %c0_77] : memref<1x8x128xf32, #tpu.memory_space<vmem>>, vector<1x8x128xf32>
    %176 = vector.shape_cast %175 : vector<1x8x128xf32> to vector<8x128xf32>
    %177 = vector.shape_cast %174 : vector<8x128xf32> to vector<1x8x128xf32>
    tpu.vector_store %arg12[%c0_75, %c0_76, %c0_77], %177 {strides = array<i32>} : memref<1x8x128xf32, #tpu.memory_space<vmem>>, vector<1x8x128xf32>,
    return
  }
  func.func @transform_0(%arg0: i32, %arg1: i32, %arg2: memref<16xi32, #tpu.memory_space<smem>>, %arg3: memref<16xi32, #tpu.memory_space<smem>>) -> (i32, i32, i32) {
    %c0_i32 = arith.constant 0 : i32
    %c0_i32_0 = arith.constant 0 : i32
    return %arg0, %c0_i32, %arg1 : i32, i32, i32
  }
  func.func @transform_1(%arg0: i32, %arg1: i32, %arg2: memref<16xi32, #tpu.memory_space<smem>>, %arg3: memref<16xi32, #tpu.memory_space<smem>>) -> (i32, i32, i32, i32) {
    %c0_i32 = arith.constant 0 : i32
    %c0_i32_0 = arith.constant 0 : i32
    %c0_i32_1 = arith.constant 0 : i32
    %c0_i32_2 = arith.constant 0 : i32
    return %arg0, %c0_i32, %c0_i32_0, %c0_i32_1 : i32, i32, i32, i32
  }
  func.func @transform_2(%arg0: i32, %arg1: i32, %arg2: memref<16xi32, #tpu.memory_space<smem>>, %arg3: memref<16xi32, #tpu.memory_space<smem>>) -> i32 {
    %c0_i32 = arith.constant 0 : i32
    %c0_i32_0 = arith.constant 0 : i32
    return %c0_i32 : i32
  }
  func.func @transform_3(%arg0: i32, %arg1: i32, %arg2: memref<16xi32, #tpu.memory_space<smem>>, %arg3: memref<16xi32, #tpu.memory_space<smem>>) -> (i32, i32) {
    %c0_i32 = arith.constant 0 : i32
    %c0_i32_0 = arith.constant 0 : i32
    %c0_i32_1 = arith.constant 0 : i32
    return %c0_i32, %c0_i32_0 : i32, i32
  }
  func.func @transform_4(%arg0: i32, %arg1: i32, %arg2: memref<16xi32, #tpu.memory_space<smem>>, %arg3: memref<16xi32, #tpu.memory_space<smem>>) -> (i32, i32) {
    %c0_i32 = arith.constant 0 : i32
    %c0_i32_0 = arith.constant 0 : i32
    %c0_i32_1 = arith.constant 0 : i32
    return %c0_i32, %c0_i32_0 : i32, i32
  }
  func.func @transform_5(%arg0: i32, %arg1: i32, %arg2: memref<16xi32, #tpu.memory_space<smem>>, %arg3: memref<16xi32, #tpu.memory_space<smem>>) -> (i32, i32) {
    %c0_i32 = arith.constant 0 : i32
    %c0_i32_0 = arith.constant 0 : i32
    %c0_i32_1 = arith.constant 0 : i32
    return %c0_i32, %c0_i32_0 : i32, i32
  }
  func.func @transform_6(%arg0: i32, %arg1: i32, %arg2: memref<16xi32, #tpu.memory_space<smem>>, %arg3: memref<16xi32, #tpu.memory_space<smem>>) -> (i32, i32) {
    %c0_i32 = arith.constant 0 : i32
    %c0_i32_0 = arith.constant 0 : i32
    %c0_i32_1 = arith.constant 0 : i32
    return %c0_i32, %c0_i32_0 : i32, i32
  }
  func.func @transform_7(%arg0: i32, %arg1: i32, %arg2: memref<16xi32, #tpu.memory_space<smem>>, %arg3: memref<16xi32, #tpu.memory_space<smem>>) -> (i32, i32) {
    %c0_i32 = arith.constant 0 : i32
    %c0_i32_0 = arith.constant 0 : i32
    %c0_i32_1 = arith.constant 0 : i32
    return %c0_i32, %c0_i32_0 : i32, i32
  }
  func.func @transform_8(%arg0: i32, %arg1: i32, %arg2: memref<16xi32, #tpu.memory_space<smem>>, %arg3: memref<16xi32, #tpu.memory_space<smem>>) -> (i32, i32, i32) {
    %c0_i32 = arith.constant 0 : i32
    %c0_i32_0 = arith.constant 0 : i32
    return %arg0, %c0_i32, %arg1 : i32, i32, i32
  }
}

</mosaic_0001>

<llo_original>
// kernel: upsample_forward.1
$region0: #{upsample_forward.1}
  #allocation0 [shape = 'u32[]', space=smem, size = 0x4, offset = 0x4, fixed_abs, tag = 'smem constant byte address 0x4 - core index']
  #allocation1 [shape = 'u32[72,128]{1,0:T(1,128)}', space=vmem, size = 0x9000, scoped, tag = 'internal scratch']
  #allocation2 [shape = 'f32[8,64]{1,0:T(8,128)}', space=vmem, size = 0x1000, scoped, tag = 'scratch operand']
  #allocation3 [shape = 's32[1]{0}', space=sflag, size = 0x4, scoped, tag = 'scoped memory for upsample_forward.1']
  #allocation4 [shape = 'u8[512]{0}', space=smem, size = 0x200, scoped, tag = 'prefetched SMEM operand 0']
  #allocation5 [shape = 'u8[512]{0}', space=smem, size = 0x200, scoped, tag = 'prefetched SMEM operand 1']
  %s0 = inlined_call_operand.vmem [shape: s32[16], index: 0, kind: input, shape index: {}]
  %s1 = inlined_call_operand.vmem [shape: s32[16], index: 1, kind: input, shape index: {}]
  %s2 = inlined_call_operand.vmem [shape: f32[2,4,256], index: 2, kind: input, shape index: {}]
  %s3 = inlined_call_operand.vmem [shape: f32[2,8,8,8], index: 3, kind: input, shape index: {}]
  %s4 = inlined_call_operand.vmem [shape: f32[16], index: 4, kind: input, shape index: {}]
  %s5 = inlined_call_operand.vmem [shape: bf16[4,4], index: 5, kind: input, shape index: {}]
  %s6 = inlined_call_operand.vmem [shape: f32[4,1], index: 6, kind: input, shape index: {}]
  %s7 = inlined_call_operand.vmem [shape: bf16[8,4], index: 7, kind: input, shape index: {}]
  %s8 = inlined_call_operand.vmem [shape: f32[8,1], index: 8, kind: input, shape index: {}]
  %s9 = inlined_call_operand.hbm [shape: f32[64,128], index: 9, kind: input, shape index: {}]
  %s10 = inlined_call_operand.vmem [shape: f32[2,8,256], index: 10, kind: output, shape index: {}]
  %s11 = sld [smem:[#allocation0]]
  $region73: #{upsample_forward.1} parent=0
    _
  %s13 = ssub.s32 1, %s11
  %s14 = scalar_select 0, %s13, %s11
  %s16 = sshll.u32 %s0, 4
  %s17 = int_to_ptr.vmem [resolvable:$true] %s16
  %19 = dma.vmem_to_smem %s17, 16, [#allocation4], [#allocation3]
  %s21 = sshll.u32 %s1, 4
  %s22 = int_to_ptr.vmem [resolvable:$true] %s21
  %24 = dma.vmem_to_smem %s22, 16, [#allocation5], [#allocation3]
  %26 = dma.done [#allocation3], 32
  %27 = sfence
  $region1: #{upsample_forward.1} parent=0
    #allocation6 [shape = 'u8[512]{0}', space=smem, size = 0x200, scoped, tag = 'input window, operand 4, single buffered']
    #allocation7 [shape = 's32[2]{0}', space=sflag, size = 0x8, scoped, tag = 'scoped memory for upsample_forward.1']
    #allocation8 [shape = 's32[2]{0}', space=sflag, size = 0x8, scoped, tag = 'scoped memory for upsample_forward.1']
    #allocation9 [shape = 'u8[32768]{0}', space=vmem, size = 0x8000, scoped, tag = 'input window, operand 9, single buffered']
    %28 = vsyncpa [#allocation8], 0
    %29 = vsyncpa [#allocation7], 0
    loop: start=0, step=1, limit=6
    $region2: #{upsample_forward.1} parent=1 // loop_pre_header
      _
    $region3: #{upsample_forward.1} parent=1 // loop_header
      %s31 = sphi 0, %s35
      %p32 = scmp.ge.s32.totalorder %s31, 6
      %s38 = sphi 0, %s50
      %s39 = sphi 0, %s46
      %s40 = sphi 0, %s38
      %s41 = sphi 0, %s39
      %s42 = sphi 0, %s40
      %s43 = sphi 0, %s41
      %s55 = sphi 0, %s57
      %s58 = sphi 0, %s55
      %s59 = sphi 0, %s58
      %s75 = sphi 0, %s59
      %s81 = sphi 0, %s83
      %s84 = sphi 0, %s81
      %s85 = sphi 0, %s84
      %s101 = sphi 0, %s85
      %s105 = sphi 0, %s105
      %s107 = sphi 0, %s105
      %s108 = sphi 0, %s107
      %s122 = sphi 0, %s108
      %s126 = sphi 0, %s126
      %s128 = sphi 0, %s126
      %s129 = sphi 0, %s128
      %s143 = sphi 0, %s129
      %s147 = sphi 0, %s147
      %s149 = sphi 0, %s147
      %s150 = sphi 0, %s149
      %s164 = sphi 0, %s150
      %s168 = sphi 0, %s168
      %s170 = sphi 0, %s168
      %s171 = sphi 0, %s170
      %s185 = sphi 0, %s171
      %s189 = sphi 0, %s189
      %s191 = sphi 0, %s189
      %s192 = sphi 0, %s191
      %s206 = sphi 0, %s192
      %s210 = sphi 0, %s210
      %s212 = sphi 0, %s210
      %s213 = sphi 0, %s212
      %s227 = sphi 0, %s213
      %s235 = sphi 0, %s237
      %s238 = sphi 0, %s235
      %s239 = sphi 0, %s238
      %s255 = sphi 0, %s239
    $region4: #{upsample_forward.1} parent=1 // loop_header_branch
      %34 = sbr.rel (%p32) target = $region8
    $region5: #{upsample_forward.1} parent=1 // loop_body
      %s36 = ssub.s32 %s31, 1
      %s37 = ssub.s32 %s31, 2
      %s44 = sadd.s32 1, %s39
      %p45 = scmp.ge.s32.totalorder %s44, 2
      %s46 = scalar_select %p45, 0, %s44
      %s47 = sadd.s32 1, %s38
      %s48 = scalar_select %p45, %s47, %s38
      %p49 = scmp.ge.s32.totalorder %s48, 2
      %s50 = scalar_select %p49, 0, %s48
      %s51 = ssub.s32 %s38, %s50
      %s52 = ssub.s32 %s39, %s46
      %s53 = sor.u32 %s51, %s52
      %p54 = scmp.eq.s32.totalorder %s53, 0
      %s56 = sadd.s32 %s55, 1
      %s57 = scalar_select %p54, %s55, %s56
      %p60 = pneg %p54
      %p61 = scmp.eq.s32.totalorder %s31, 3
      %p62 = por %p60, %p61
      %p63 = scmp.ne.s32.totalorder %s55, %s58
      %p64 = scmp.eq.s32.totalorder %s31, 0
      %p65 = por %p63, %p64
      %p66 = scmp.ne.s32.totalorder %s55, %s58
      %p67 = scmp.eq.s32.totalorder %s36, 3
      %p68 = por %p66, %p67
      %p69 = scmp.ne.s32.totalorder %s58, %s59
      %p70 = scmp.eq.s32.totalorder %s36, 0
      %p71 = por %p69, %p70
      %p72 = scmp.ne.s32.totalorder %s58, %s59
      %p73 = scmp.eq.s32.totalorder %s37, 3
      %p74 = por %p72, %p73
      %p76 = scmp.ne.s32.totalorder %s59, %s75
      %p77 = scmp.eq.s32.totalorder %s37, 0
      %p78 = por %p76, %p77
      %s79 = ssub.s32 %s38, %s50
      %p80 = scmp.eq.s32.totalorder %s79, 0
      %s82 = sadd.s32 %s81, 1
      %s83 = scalar_select %p80, %s81, %s82
      %p86 = pneg %p80
      %p87 = scmp.eq.s32.totalorder %s31, 3
      %p88 = por %p86, %p87
      %p89 = scmp.ne.s32.totalorder %s81, %s84
      %p90 = scmp.eq.s32.totalorder %s31, 0
      %p91 = por %p89, %p90
      %p92 = scmp.ne.s32.totalorder %s81, %s84
      %p93 = scmp.eq.s32.totalorder %s36, 3
      %p94 = por %p92, %p93
      %p95 = scmp.ne.s32.totalorder %s84, %s85
      %p96 = scmp.eq.s32.totalorder %s36, 0
      %p97 = por %p95, %p96
      %p98 = scmp.ne.s32.totalorder %s84, %s85
      %p99 = scmp.eq.s32.totalorder %s37, 3
      %p100 = por %p98, %p99
      %p102 = scmp.ne.s32.totalorder %s85, %s101
      %p103 = scmp.eq.s32.totalorder %s37, 0
      %p104 = por %p102, %p103
      %s106 = sadd.s32 %s105, 1
      %p109 = scmp.eq.s32.totalorder %s31, 3
      %p110 = scmp.ne.s32.totalorder %s105, %s107
      %p111 = scmp.eq.s32.totalorder %s31, 0
      %p112 = por %p110, %p111
      %p113 = scmp.ne.s32.totalorder %s105, %s107
      %p114 = scmp.eq.s32.totalorder %s36, 3
      %p115 = por %p113, %p114
      %p116 = scmp.ne.s32.totalorder %s107, %s108
      %p117 = scmp.eq.s32.totalorder %s36, 0
      %p118 = por %p116, %p117
      %p119 = scmp.ne.s32.totalorder %s107, %s108
      %p120 = scmp.eq.s32.totalorder %s37, 3
      %p121 = por %p119, %p120
      %p123 = scmp.ne.s32.totalorder %s108, %s122
      %p124 = scmp.eq.s32.totalorder %s37, 0
      %p125 = por %p123, %p124
      %s127 = sadd.s32 %s126, 1
      %p130 = scmp.eq.s32.totalorder %s31, 3
      %p131 = scmp.ne.s32.totalorder %s126, %s128
      %p132 = scmp.eq.s32.totalorder %s31, 0
      %p133 = por %p131, %p132
      %p134 = scmp.ne.s32.totalorder %s126, %s128
      %p135 = scmp.eq.s32.totalorder %s36, 3
      %p136 = por %p134, %p135
      %p137 = scmp.ne.s32.totalorder %s128, %s129
      %p138 = scmp.eq.s32.totalorder %s36, 0
      %p139 = por %p137, %p138
      %p140 = scmp.ne.s32.totalorder %s128, %s129
      %p141 = scmp.eq.s32.totalorder %s37, 3
      %p142 = por %p140, %p141
      %p144 = scmp.ne.s32.totalorder %s129, %s143
      %p145 = scmp.eq.s32.totalorder %s37, 0
      %p146 = por %p144, %p145
      %s148 = sadd.s32 %s147, 1
      %p151 = scmp.eq.s32.totalorder %s31, 3
      %p152 = scmp.ne.s32.totalorder %s147, %s149
      %p153 = scmp.eq.s32.totalorder %s31, 0
      %p154 = por %p152, %p153
      %p155 = scmp.ne.s32.totalorder %s147, %s149
      %p156 = scmp.eq.s32.totalorder %s36, 3
      %p157 = por %p155, %p156
      %p158 = scmp.ne.s32.totalorder %s149, %s150
      %p159 = scmp.eq.s32.totalorder %s36, 0
      %p160 = por %p158, %p159
      %p161 = scmp.ne.s32.totalorder %s149, %s150
      %p162 = scmp.eq.s32.totalorder %s37, 3
      %p163 = por %p161, %p162
      %p165 = scmp.ne.s32.totalorder %s150, %s164
      %p166 = scmp.eq.s32.totalorder %s37, 0
      %p167 = por %p165, %p166
      %s169 = sadd.s32 %s168, 1
      %p172 = scmp.eq.s32.totalorder %s31, 3
      %p173 = scmp.ne.s32.totalorder %s168, %s170
      %p174 = scmp.eq.s32.totalorder %s31, 0
      %p175 = por %p173, %p174
      %p176 = scmp.ne.s32.totalorder %s168, %s170
      %p177 = scmp.eq.s32.totalorder %s36, 3
      %p178 = por %p176, %p177
      %p179 = scmp.ne.s32.totalorder %s170, %s171
      %p180 = scmp.eq.s32.totalorder %s36, 0
      %p181 = por %p179, %p180
      %p182 = scmp.ne.s32.totalorder %s170, %s171
      %p183 = scmp.eq.s32.totalorder %s37, 3
      %p184 = por %p182, %p183
      %p186 = scmp.ne.s32.totalorder %s171, %s185
      %p187 = scmp.eq.s32.totalorder %s37, 0
      %p188 = por %p186, %p187
      %s190 = sadd.s32 %s189, 1
      %p193 = scmp.eq.s32.totalorder %s31, 3
      %p194 = scmp.ne.s32.totalorder %s189, %s191
      %p195 = scmp.eq.s32.totalorder %s31, 0
      %p196 = por %p194, %p195
      %p197 = scmp.ne.s32.totalorder %s189, %s191
      %p198 = scmp.eq.s32.totalorder %s36, 3
      %p199 = por %p197, %p198
      %p200 = scmp.ne.s32.totalorder %s191, %s192
      %p201 = scmp.eq.s32.totalorder %s36, 0
      %p202 = por %p200, %p201
      %p203 = scmp.ne.s32.totalorder %s191, %s192
      %p204 = scmp.eq.s32.totalorder %s37, 3
      %p205 = por %p203, %p204
      %p207 = scmp.ne.s32.totalorder %s192, %s206
      %p208 = scmp.eq.s32.totalorder %s37, 0
      %p209 = por %p207, %p208
      %s211 = sadd.s32 %s210, 1
      %p214 = scmp.eq.s32.totalorder %s31, 3
      %p215 = scmp.ne.s32.totalorder %s210, %s212
      %p216 = scmp.eq.s32.totalorder %s31, 0
      %p217 = por %p215, %p216
      %p218 = scmp.ne.s32.totalorder %s210, %s212
      %p219 = scmp.eq.s32.totalorder %s36, 3
      %p220 = por %p218, %p219
      %p221 = scmp.ne.s32.totalorder %s212, %s213
      %p222 = scmp.eq.s32.totalorder %s36, 0
      %p223 = por %p221, %p222
      %p224 = scmp.ne.s32.totalorder %s212, %s213
      %p225 = scmp.eq.s32.totalorder %s37, 3
      %p226 = por %p224, %p225
      %p228 = scmp.ne.s32.totalorder %s213, %s227
      %p229 = scmp.eq.s32.totalorder %s37, 0
      %p230 = por %p228, %p229
      %s231 = ssub.s32 %s38, %s50
      %s232 = ssub.s32 %s39, %s46
      %s233 = sor.u32 %s231, %s232
      %p234 = scmp.eq.s32.totalorder %s233, 0
      %s236 = sadd.s32 %s235, 1
      %s237 = scalar_select %p234, %s235, %s236
      %p240 = pneg %p234
      %p241 = scmp.eq.s32.totalorder %s31, 3
      %p242 = por %p240, %p241
      %p243 = scmp.ne.s32.totalorder %s235, %s238
      %p244 = scmp.eq.s32.totalorder %s31, 0
      %p245 = por %p243, %p244
      %p246 = scmp.ne.s32.totalorder %s235, %s238
      %p247 = scmp.eq.s32.totalorder %s36, 3
      %p248 = por %p246, %p247
      %p249 = scmp.ne.s32.totalorder %s238, %s239
      %p250 = scmp.eq.s32.totalorder %s36, 0
      %p251 = por %p249, %p250
      %p252 = scmp.ne.s32.totalorder %s238, %s239
      %p253 = scmp.eq.s32.totalorder %s37, 3
      %p254 = por %p252, %p253
      %p256 = scmp.ne.s32.totalorder %s239, %s255
      %p257 = scmp.eq.s32.totalorder %s37, 0
      %p258 = por %p256, %p257
      %p259 = scmp.le.s32.totalorder 1, %s31
      %p260 = scmp.lt.s32.totalorder %s31, 5
      %p261 = pnand %p259, %p260
      %p262 = pneg %p261
      // Predicated region
      $region9: #{upsample_forward.1} parent=5 // pred_check
        _
      $region10: #{upsample_forward.1} parent=5 // pred_check_branch
        %264 = sbr.rel (%p261) target = $region12
      $region11: #{upsample_forward.1} parent=5 // pred_region
        %s265 = ssub.s32 %s31, 1
        // Predicated region
        $region13: #{upsample_forward.1} parent=11 // pred_check
          %p266 = pneg %p118
        $region14: #{upsample_forward.1} parent=11 // pred_check_branch
          %268 = sbr.rel (%p266) target = $region16
        $region15: #{upsample_forward.1} parent=11 // pred_region
          %270 = vsyncadd [#allocation8], 0
          %s272 = sshll.u32 %s4, 4
          %s273 = int_to_ptr.vmem [resolvable:$true] %s272
          %275 = dma.vmem_to_smem %s273, 16, [#allocation6], [#allocation8]
        $region16: #{upsample_forward.1} parent=11 // pred_fallthru
          _
        // Predicated region
        $region17: #{upsample_forward.1} parent=11 // pred_check
          %p276 = pneg %p139
        $region18: #{upsample_forward.1} parent=11 // pred_check_branch
          %278 = sbr.rel (%p276) target = $region20
        $region19: #{upsample_forward.1} parent=11 // pred_region
          _
        $region20: #{upsample_forward.1} parent=11 // pred_fallthru
          _
        // Predicated region
        $region21: #{upsample_forward.1} parent=11 // pred_check
          %p279 = pneg %p160
        $region22: #{upsample_forward.1} parent=11 // pred_check_branch
          %281 = sbr.rel (%p279) target = $region24
        $region23: #{upsample_forward.1} parent=11 // pred_region
          _
        $region24: #{upsample_forward.1} parent=11 // pred_fallthru
          _
        // Predicated region
        $region25: #{upsample_forward.1} parent=11 // pred_check
          %p282 = pneg %p181
        $region26: #{upsample_forward.1} parent=11 // pred_check_branch
          %284 = sbr.rel (%p282) target = $region28
        $region27: #{upsample_forward.1} parent=11 // pred_region
          _
        $region28: #{upsample_forward.1} parent=11 // pred_fallthru
          _
        // Predicated region
        $region29: #{upsample_forward.1} parent=11 // pred_check
          %p285 = pneg %p202
        $region30: #{upsample_forward.1} parent=11 // pred_check_branch
          %287 = sbr.rel (%p285) target = $region32
        $region31: #{upsample_forward.1} parent=11 // pred_region
          _
        $region32: #{upsample_forward.1} parent=11 // pred_fallthru
          _
        // Predicated region
        $region33: #{upsample_forward.1} parent=11 // pred_check
          %p288 = pneg %p223
        $region34: #{upsample_forward.1} parent=11 // pred_check_branch
          %290 = sbr.rel (%p288) target = $region36
        $region35: #{upsample_forward.1} parent=11 // pred_region
          %292 = vsyncadd [#allocation7], 0
          %s293 = sshll.u32 %s9, 4
          %s294 = int_to_ptr.hbm [resolvable:$true] %s293
          %s295 = sshll.u32 [#allocation9], 4
          %s296 = int_to_ptr.vmem [resolvable:$true] %s295
          %301 = dma.hbm_to_vmem [thread:$0]  %s294, 1024, %s296, [#allocation7], 128, 128, 8
        $region36: #{upsample_forward.1} parent=11 // pred_fallthru
          _
      $region12: #{upsample_forward.1} parent=5 // pred_fallthru
        _
      %p302 = scmp.lt.s32.totalorder %s31, 4
      // Predicated region
      $region37: #{upsample_forward.1} parent=5 // pred_check
        %p303 = pneg %p302
      $region38: #{upsample_forward.1} parent=5 // pred_check_branch
        %305 = sbr.rel (%p303) target = $region40
      $region39: #{upsample_forward.1} parent=5 // pred_region
        // Predicated region
        $region41: #{upsample_forward.1} parent=39 // pred_check
          %p306 = pneg %p65
        $region42: #{upsample_forward.1} parent=39 // pred_check_branch
          %308 = sbr.rel (%p306) target = $region44
        $region43: #{upsample_forward.1} parent=39 // pred_region
          %p309 = scmp.lt.s32.totalorder %s38, 1
          %s310 = scalar_select %p309, %s38, 1
          %p311 = scmp.lt.s32.totalorder %s39, 1
          %s312 = scalar_select %p311, %s39, 1
          %s313 = smul.addr %s310, 2
          %s314 = sadd.s32 %s312, %s313
          %s315 = smul.addr %s314, 4
          %s316 = scalar_lea.vmem %s2, %s315
        $region44: #{upsample_forward.1} parent=39 // pred_fallthru
          _
        // Predicated region
        $region45: #{upsample_forward.1} parent=39 // pred_check
          %p317 = pneg %p91
        $region46: #{upsample_forward.1} parent=39 // pred_check_branch
          %319 = sbr.rel (%p317) target = $region48
        $region47: #{upsample_forward.1} parent=39 // pred_region
          %p320 = scmp.lt.s32.totalorder %s38, 1
          %s321 = scalar_select %p320, %s38, 1
          %s322 = smul.addr %s321, 8
          %s323 = smul.addr %s322, 8
          %s324 = scalar_lea.vmem %s3, %s323
        $region48: #{upsample_forward.1} parent=39 // pred_fallthru
          _
      $region40: #{upsample_forward.1} parent=5 // pred_fallthru
        _
      %p325 = scmp.le.s32.totalorder 1, %s31
      %p326 = scmp.lt.s32.totalorder %s31, 5
      %p327 = pnand %p325, %p326
      %p328 = pneg %p327
      // Predicated region
      $region49: #{upsample_forward.1} parent=5 // pred_check
        _
      $region50: #{upsample_forward.1} parent=5 // pred_check_branch
        %330 = sbr.rel (%p327) target = $region52
      $region51: #{upsample_forward.1} parent=5 // pred_region
        %s331 = ssub.s32 %s31, 1
        // Predicated region
        $region53: #{upsample_forward.1} parent=51 // pred_check
          %p332 = pneg %p118
        $region54: #{upsample_forward.1} parent=51 // pred_check_branch
          %334 = sbr.rel (%p332) target = $region56
        $region55: #{upsample_forward.1} parent=51 // pred_region
          %336 = dma.done [#allocation8], 16
        $region56: #{upsample_forward.1} parent=51 // pred_fallthru
          _
        // Predicated region
        $region57: #{upsample_forward.1} parent=51 // pred_check
          %p337 = pneg %p223
        $region58: #{upsample_forward.1} parent=51 // pred_check_branch
          %339 = sbr.rel (%p337) target = $region60
        $region59: #{upsample_forward.1} parent=51 // pred_region
          %341 = dma.done [#allocation7], 1024
        $region60: #{upsample_forward.1} parent=51 // pred_fallthru
          _
        %342 = sfence
        %p343 = scmp.lt.s32.totalorder %s40, 1
        %s344 = scalar_select %p343, %s40, 1
        %p345 = scmp.lt.s32.totalorder %s41, 1
        %s346 = scalar_select %p345, %s41, 1
        %s347 = smul.addr %s344, 2
        %s348 = sadd.s32 %s346, %s347
        %s349 = smul.addr %s348, 4
        %s350 = scalar_lea.vmem %s2, %s349
        %p351 = pneg %p71
        %p352 = pneg %p68
        %p353 = scmp.lt.s32.totalorder %s40, 1
        %s354 = scalar_select %p353, %s40, 1
        %s355 = smul.addr %s354, 8
        %s356 = smul.addr %s355, 8
        %s357 = scalar_lea.vmem %s3, %s356
        %p358 = pneg %p97
        %p359 = pneg %p94
        %p360 = pneg %p118
        %p361 = pneg %p115
        %p362 = pneg %p139
        %p363 = pneg %p136
        %p364 = pneg %p160
        %p365 = pneg %p157
        %p366 = pneg %p181
        %p367 = pneg %p178
        %p368 = pneg %p202
        %p369 = pneg %p199
        %p370 = pneg %p223
        %p371 = pneg %p220
        %p372 = pneg %p251
        %p373 = pneg %p248
        %p374 = scmp.lt.s32.totalorder %s40, 1
        %s375 = scalar_select %p374, %s40, 1
        %p376 = scmp.lt.s32.totalorder %s41, 1
        %s377 = scalar_select %p376, %s41, 1
        %s378 = smul.addr %s375, 2
        %s379 = sadd.s32 %s377, %s378
        %s380 = smul.addr %s379, 8
        %s381 = scalar_lea.vmem %s10, %s380
        %p382 = scmp.lt.s32.totalorder %s40, 1
        %s383 = scalar_select %p382, %s40, 1
        %p384 = scmp.lt.s32.totalorder %s41, 1
        %s385 = scalar_select %p384, %s41, 1
        %s386 = smul.addr %s383, 2
        %s387 = sadd.s32 %s385, %s386
        %s388 = smul.addr %s387, 4
        %s389 = scalar_lea.vmem %s2, %s388
        %p390 = scmp.lt.s32.totalorder %s40, 1
        %s391 = scalar_select %p390, %s40, 1
        %s392 = smul.addr %s391, 8
        %s393 = smul.addr %s392, 8
        %s394 = scalar_lea.vmem %s3, %s393
        %p395 = scmp.lt.s32.totalorder %s40, 1
        %s396 = scalar_select %p395, %s40, 1
        %p397 = scmp.lt.s32.totalorder %s41, 1
        %s398 = scalar_select %p397, %s41, 1
        %s399 = smul.addr %s396, 2
        %s400 = sadd.s32 %s398, %s399
        %s401 = smul.addr %s400, 8
        %s402 = scalar_lea.vmem %s10, %s401
        %s404 = smul.u32 %s41, 8
        %v405 = vld [vmem:[%s389] sm:$0xf]
        %v406 = vpack.c.bf16 %v405, %v405
        %v407 = vld [vmem:[%s5] sm:$0x3]
        %v408 = vld [vmem:[%s6] sm:$0xf]
        %410 = vset.pattern.permute.xlu0 0
        %411 = vperm.xlu0 %410, %v408
        %v412 = vpop.permute.xlu0 %411
        %vm414 = vcmask 31744
        %v416 = vsel %vm414, %v407, 0
        %vm418 = vcmask 1041408
        %v420 = vsel %vm418, %v406, 0
        %422 = vmatpush.bf16.msra.mxu0 0
        %423 = vmatpush.bf16.msra.mxu0 0
        %424 = vmatpush.bf16.msra.mxu0 0
        %425 = vmatpush.bf16.msra.mxu0 0
        %426 = vmatpush.bf16.msra.mxu0 0
        %427 = vmatpush.bf16.msra.mxu0 0
        %428 = vmatpush.bf16.msra.mxu0 0
        %429 = vmatpush.bf16.msra.mxu0 %v420
        %430 = vmatmul.bf16.gmra.mxu0 %v416
        %v431 = vpop.f32.mrf.mxu0
        %v432 = vadd.f32 %v412, %v431
        %v433 = vpop.f32.mrf.mxu0
        %434 = vdwg.mxu0
        %v435 = vmax.f32 %v432, 0.0
        %v436 = vld [vmem:[%s7] sm:$0xf]
        %v437 = vpack.c.bf16 %v435, %v435
        %v438 = vld [vmem:[%s8] sm:$0xff]
        %440 = vset.pattern.permute.xlu0 0
        %441 = vperm.xlu0 %440, %v438
        %v442 = vpop.permute.xlu0 %441
        %v445 = vsel %vm414, %v436, 0
        %v448 = vsel %vm418, %v437, 0
        %450 = vmatpush.bf16.msra.mxu0 0
        %451 = vmatpush.bf16.msra.mxu0 0
        %452 = vmatpush.bf16.msra.mxu0 0
        %453 = vmatpush.bf16.msra.mxu0 0
        %454 = vmatpush.bf16.msra.mxu0 0
        %455 = vmatpush.bf16.msra.mxu0 0
        %456 = vmatpush.bf16.msra.mxu0 0
        %457 = vmatpush.bf16.msra.mxu0 %v448
        %458 = vmatmul.bf16.gmra.mxu0 %v445
        %v459 = vpop.f32.mrf.mxu0
        %v460 = vadd.f32 %v442, %v459
        %v461 = vpop.f32.mrf.mxu0
        %462 = vdwg.mxu0
        %v463 = vmax.f32 %v460, 0.0
        %s464 = sld [smem:[#allocation4 + %s404]]
        %s465 = sld [smem:[#allocation5 + %s404]]
        %s466 = sld [smem:[#allocation6 + %s404]]
        %s467 = scalar_lea.vmem %s394, %s464
        %v468 = vld [vmem:[%s467] sm:$0x1]
        %v469 = vld [vmem:[%s467 + $0x8] sm:$0x1]
        %v470 = vld [vmem:[%s467 + $0x10] sm:$0x1]
        %v471 = vld [vmem:[%s467 + $0x18] sm:$0x1]
        %v472 = vld [vmem:[%s467 + $0x20] sm:$0x1]
        %v473 = vld [vmem:[%s467 + $0x28] sm:$0x1]
        %v474 = vld [vmem:[%s467 + $0x30] sm:$0x1]
        %v475 = vld [vmem:[%s467 + $0x38] sm:$0x1]
        %s476 = scalar_lea.vmem %s394, %s465
        %v477 = vld [vmem:[%s476] sm:$0x1]
        %v478 = vld [vmem:[%s476 + $0x8] sm:$0x1]
        %v479 = vld [vmem:[%s476 + $0x10] sm:$0x1]
        %v480 = vld [vmem:[%s476 + $0x18] sm:$0x1]
        %v481 = vld [vmem:[%s476 + $0x20] sm:$0x1]
        %v482 = vld [vmem:[%s476 + $0x28] sm:$0x1]
        %v483 = vld [vmem:[%s476 + $0x30] sm:$0x1]
        %v484 = vld [vmem:[%s476 + $0x38] sm:$0x1]
        %v485 = vsub.f32 %v477, %v468
        %v486 = vsub.f32 %v478, %v469
        %v487 = vsub.f32 %v479, %v470
        %v488 = vsub.f32 %v480, %v471
        %v489 = vsub.f32 %v481, %v472
        %v490 = vsub.f32 %v482, %v473
        %v491 = vsub.f32 %v483, %v474
        %v492 = vsub.f32 %v484, %v475
        %v493 = vstv %s466
        %v494 = vmul.f32 %v493, %v485
        %v495 = vmul.f32 %v493, %v486
        %v496 = vmul.f32 %v493, %v487
        %v497 = vmul.f32 %v493, %v488
        %v498 = vmul.f32 %v493, %v489
        %v499 = vmul.f32 %v493, %v490
        %v500 = vmul.f32 %v493, %v491
        %v501 = vmul.f32 %v493, %v492
        %v502 = vadd.f32 %v468, %v494
        %v503 = vadd.f32 %v469, %v495
        %v504 = vadd.f32 %v470, %v496
        %v505 = vadd.f32 %v471, %v497
        %v506 = vadd.f32 %v472, %v498
        %v507 = vadd.f32 %v473, %v499
        %v508 = vadd.f32 %v474, %v500
        %v509 = vadd.f32 %v475, %v501
        %v518 = vrot.slane %v503, 7
        %vm519 = vcmask 1041409
        %v520 = vsel %vm519, %v518, %v502
        %v521 = vrot.slane %v504, 6
        %vm522 = vcmask 1042434
        %v523 = vsel %vm522, %v521, %v520
        %v524 = vrot.slane %v505, 5
        %vm525 = vcmask 1043459
        %v526 = vsel %vm525, %v524, %v523
        %v527 = vrot.slane %v506, 4
        %vm528 = vcmask 1044484
        %v529 = vsel %vm528, %v527, %v526
        %v530 = vrot.slane %v507, 3
        %vm531 = vcmask 1045509
        %v532 = vsel %vm531, %v530, %v529
        %v533 = vrot.slane %v508, 2
        %vm534 = vcmask 1046534
        %v535 = vsel %vm534, %v533, %v532
        %v536 = vrot.slane %v509, 1
        %vm537 = vcmask 1047559
        %v538 = vsel %vm537, %v536, %v535
        %vm540 = vcmask 64512
        %541 = vst.msk [vmem:[#allocation2] sm:$0xff] %vm540, %v538
        %s542 = sadd.s32 %s404, 1
        %s543 = sld [smem:[#allocation4 + %s542]]
        %s544 = sld [smem:[#allocation5 + %s542]]
        %s545 = sld [smem:[#allocation6 + %s542]]
        %s546 = scalar_lea.vmem %s394, %s543
        %v547 = vld [vmem:[%s546] sm:$0x1]
        %v548 = vld [vmem:[%s546 + $0x8] sm:$0x1]
        %v549 = vld [vmem:[%s546 + $0x10] sm:$0x1]
        %v550 = vld [vmem:[%s546 + $0x18] sm:$0x1]
        %v551 = vld [vmem:[%s546 + $0x20] sm:$0x1]
        %v552 = vld [vmem:[%s546 + $0x28] sm:$0x1]
        %v553 = vld [vmem:[%s546 + $0x30] sm:$0x1]
        %v554 = vld [vmem:[%s546 + $0x38] sm:$0x1]
        %s555 = scalar_lea.vmem %s394, %s544
        %v556 = vld [vmem:[%s555] sm:$0x1]
        %v557 = vld [vmem:[%s555 + $0x8] sm:$0x1]
        %v558 = vld [vmem:[%s555 + $0x10] sm:$0x1]
        %v559 = vld [vmem:[%s555 + $0x18] sm:$0x1]
        %v560 = vld [vmem:[%s555 + $0x20] sm:$0x1]
        %v561 = vld [vmem:[%s555 + $0x28] sm:$0x1]
        %v562 = vld [vmem:[%s555 + $0x30] sm:$0x1]
        %v563 = vld [vmem:[%s555 + $0x38] sm:$0x1]
        %v564 = vsub.f32 %v556, %v547
        %v565 = vsub.f32 %v557, %v548
        %v566 = vsub.f32 %v558, %v549
        %v567 = vsub.f32 %v559, %v550
        %v568 = vsub.f32 %v560, %v551
        %v569 = vsub.f32 %v561, %v552
        %v570 = vsub.f32 %v562, %v553
        %v571 = vsub.f32 %v563, %v554
        %v572 = vstv %s545
        %v573 = vmul.f32 %v572, %v564
        %v574 = vmul.f32 %v572, %v565
        %v575 = vmul.f32 %v572, %v566
        %v576 = vmul.f32 %v572, %v567
        %v577 = vmul.f32 %v572, %v568
        %v578 = vmul.f32 %v572, %v569
        %v579 = vmul.f32 %v572, %v570
        %v580 = vmul.f32 %v572, %v571
        %v581 = vadd.f32 %v547, %v573
        %v582 = vadd.f32 %v548, %v574
        %v583 = vadd.f32 %v549, %v575
        %v584 = vadd.f32 %v550, %v576
        %v585 = vadd.f32 %v551, %v577
        %v586 = vadd.f32 %v552, %v578
        %v587 = vadd.f32 %v553, %v579
        %v588 = vadd.f32 %v554, %v580
        %v597 = vrot.slane %v582, 7
        %v598 = vsel %vm519, %v597, %v581
        %v599 = vrot.slane %v583, 6
        %v600 = vsel %vm522, %v599, %v598
        %v601 = vrot.slane %v584, 5
        %v602 = vsel %vm525, %v601, %v600
        %v603 = vrot.slane %v585, 4
        %v604 = vsel %vm528, %v603, %v602
        %v605 = vrot.slane %v586, 3
        %v606 = vsel %vm531, %v605, %v604
        %v607 = vrot.slane %v587, 2
        %v608 = vsel %vm534, %v607, %v606
        %v609 = vrot.slane %v588, 1
        %v610 = vsel %vm537, %v609, %v608
        %611 = vrot.lane.b32.xlu0 %v610, 8
        %v612 = vpop.permute.xlu0 %611
        %vm614 = vcmask 130112
        %615 = vst.msk [vmem:[#allocation2] sm:$0xff] %vm614, %v612
        %s616 = sadd.s32 %s404, 2
        %s617 = sld [smem:[#allocation4 + %s616]]
        %s618 = sld [smem:[#allocation5 + %s616]]
        %s619 = sld [smem:[#allocation6 + %s616]]
        %s620 = scalar_lea.vmem %s394, %s617
        %v621 = vld [vmem:[%s620] sm:$0x1]
        %v622 = vld [vmem:[%s620 + $0x8] sm:$0x1]
        %v623 = vld [vmem:[%s620 + $0x10] sm:$0x1]
        %v624 = vld [vmem:[%s620 + $0x18] sm:$0x1]
        %v625 = vld [vmem:[%s620 + $0x20] sm:$0x1]
        %v626 = vld [vmem:[%s620 + $0x28] sm:$0x1]
        %v627 = vld [vmem:[%s620 + $0x30] sm:$0x1]
        %v628 = vld [vmem:[%s620 + $0x38] sm:$0x1]
        %s629 = scalar_lea.vmem %s394, %s618
        %v630 = vld [vmem:[%s629] sm:$0x1]
        %v631 = vld [vmem:[%s629 + $0x8] sm:$0x1]
        %v632 = vld [vmem:[%s629 + $0x10] sm:$0x1]
        %v633 = vld [vmem:[%s629 + $0x18] sm:$0x1]
        %v634 = vld [vmem:[%s629 + $0x20] sm:$0x1]
        %v635 = vld [vmem:[%s629 + $0x28] sm:$0x1]
        %v636 = vld [vmem:[%s629 + $0x30] sm:$0x1]
        %v637 = vld [vmem:[%s629 + $0x38] sm:$0x1]
        %v638 = vsub.f32 %v630, %v621
        %v639 = vsub.f32 %v631, %v622
        %v640 = vsub.f32 %v632, %v623
        %v641 = vsub.f32 %v633, %v624
        %v642 = vsub.f32 %v634, %v625
        %v643 = vsub.f32 %v635, %v626
        %v644 = vsub.f32 %v636, %v627
        %v645 = vsub.f32 %v637, %v628
        %v646 = vstv %s619
        %v647 = vmul.f32 %v646, %v638
        %v648 = vmul.f32 %v646, %v639
        %v649 = vmul.f32 %v646, %v640
        %v650 = vmul.f32 %v646, %v641
        %v651 = vmul.f32 %v646, %v642
        %v652 = vmul.f32 %v646, %v643
        %v653 = vmul.f32 %v646, %v644
        %v654 = vmul.f32 %v646, %v645
        %v655 = vadd.f32 %v621, %v647
        %v656 = vadd.f32 %v622, %v648
        %v657 = vadd.f32 %v623, %v649
        %v658 = vadd.f32 %v624, %v650
        %v659 = vadd.f32 %v625, %v651
        %v660 = vadd.f32 %v626, %v652
        %v661 = vadd.f32 %v627, %v653
        %v662 = vadd.f32 %v628, %v654
        %v671 = vrot.slane %v656, 7
        %v672 = vsel %vm519, %v671, %v655
        %v673 = vrot.slane %v657, 6
        %v674 = vsel %vm522, %v673, %v672
        %v675 = vrot.slane %v658, 5
        %v676 = vsel %vm525, %v675, %v674
        %v677 = vrot.slane %v659, 4
        %v678 = vsel %vm528, %v677, %v676
        %v679 = vrot.slane %v660, 3
        %v680 = vsel %vm531, %v679, %v678
        %v681 = vrot.slane %v661, 2
        %v682 = vsel %vm534, %v681, %v680
        %v683 = vrot.slane %v662, 1
        %v684 = vsel %vm537, %v683, %v682
        %685 = vrot.lane.b32.xlu0 %v684, 16
        %v686 = vpop.permute.xlu0 %685
        %vm688 = vcmask 195712
        %689 = vst.msk [vmem:[#allocation2] sm:$0xff] %vm688, %v686
        %s690 = sadd.s32 %s404, 3
        %s691 = sld [smem:[#allocation4 + %s690]]
        %s692 = sld [smem:[#allocation5 + %s690]]
        %s693 = sld [smem:[#allocation6 + %s690]]
        %s694 = scalar_lea.vmem %s394, %s691
        %v695 = vld [vmem:[%s694] sm:$0x1]
        %v696 = vld [vmem:[%s694 + $0x8] sm:$0x1]
        %v697 = vld [vmem:[%s694 + $0x10] sm:$0x1]
        %v698 = vld [vmem:[%s694 + $0x18] sm:$0x1]
        %v699 = vld [vmem:[%s694 + $0x20] sm:$0x1]
        %v700 = vld [vmem:[%s694 + $0x28] sm:$0x1]
        %v701 = vld [vmem:[%s694 + $0x30] sm:$0x1]
        %v702 = vld [vmem:[%s694 + $0x38] sm:$0x1]
        %s703 = scalar_lea.vmem %s394, %s692
        %v704 = vld [vmem:[%s703] sm:$0x1]
        %v705 = vld [vmem:[%s703 + $0x8] sm:$0x1]
        %v706 = vld [vmem:[%s703 + $0x10] sm:$0x1]
        %v707 = vld [vmem:[%s703 + $0x18] sm:$0x1]
        %v708 = vld [vmem:[%s703 + $0x20] sm:$0x1]
        %v709 = vld [vmem:[%s703 + $0x28] sm:$0x1]
        %v710 = vld [vmem:[%s703 + $0x30] sm:$0x1]
        %v711 = vld [vmem:[%s703 + $0x38] sm:$0x1]
        %v712 = vsub.f32 %v704, %v695
        %v713 = vsub.f32 %v705, %v696
        %v714 = vsub.f32 %v706, %v697
        %v715 = vsub.f32 %v707, %v698
        %v716 = vsub.f32 %v708, %v699
        %v717 = vsub.f32 %v709, %v700
        %v718 = vsub.f32 %v710, %v701
        %v719 = vsub.f32 %v711, %v702
        %v720 = vstv %s693
        %v721 = vmul.f32 %v720, %v712
        %v722 = vmul.f32 %v720, %v713
        %v723 = vmul.f32 %v720, %v714
        %v724 = vmul.f32 %v720, %v715
        %v725 = vmul.f32 %v720, %v716
        %v726 = vmul.f32 %v720, %v717
        %v727 = vmul.f32 %v720, %v718
        %v728 = vmul.f32 %v720, %v719
        %v729 = vadd.f32 %v695, %v721
        %v730 = vadd.f32 %v696, %v722
        %v731 = vadd.f32 %v697, %v723
        %v732 = vadd.f32 %v698, %v724
        %v733 = vadd.f32 %v699, %v725
        %v734 = vadd.f32 %v700, %v726
        %v735 = vadd.f32 %v701, %v727
        %v736 = vadd.f32 %v702, %v728
        %v745 = vrot.slane %v730, 7
        %v746 = vsel %vm519, %v745, %v729
        %v747 = vrot.slane %v731, 6
        %v748 = vsel %vm522, %v747, %v746
        %v749 = vrot.slane %v732, 5
        %v750 = vsel %vm525, %v749, %v748
        %v751 = vrot.slane %v733, 4
        %v752 = vsel %vm528, %v751, %v750
        %v753 = vrot.slane %v734, 3
        %v754 = vsel %vm531, %v753, %v752
        %v755 = vrot.slane %v735, 2
        %v756 = vsel %vm534, %v755, %v754
        %v757 = vrot.slane %v736, 1
        %v758 = vsel %vm537, %v757, %v756
        %759 = vrot.lane.b32.xlu0 %v758, 24
        %v760 = vpop.permute.xlu0 %759
        %vm762 = vcmask 261312
        %763 = vst.msk [vmem:[#allocation2] sm:$0xff] %vm762, %v760
        %s764 = sadd.s32 %s404, 4
        %s765 = sld [smem:[#allocation4 + %s764]]
        %s766 = sld [smem:[#allocation5 + %s764]]
        %s767 = sld [smem:[#allocation6 + %s764]]
        %s768 = scalar_lea.vmem %s394, %s765
        %v769 = vld [vmem:[%s768] sm:$0x1]
        %v770 = vld [vmem:[%s768 + $0x8] sm:$0x1]
        %v771 = vld [vmem:[%s768 + $0x10] sm:$0x1]
        %v772 = vld [vmem:[%s768 + $0x18] sm:$0x1]
        %v773 = vld [vmem:[%s768 + $0x20] sm:$0x1]
        %v774 = vld [vmem:[%s768 + $0x28] sm:$0x1]
        %v775 = vld [vmem:[%s768 + $0x30] sm:$0x1]
        %v776 = vld [vmem:[%s768 + $0x38] sm:$0x1]
        %s777 = scalar_lea.vmem %s394, %s766
        %v778 = vld [vmem:[%s777] sm:$0x1]
        %v779 = vld [vmem:[%s777 + $0x8] sm:$0x1]
        %v780 = vld [vmem:[%s777 + $0x10] sm:$0x1]
        %v781 = vld [vmem:[%s777 + $0x18] sm:$0x1]
        %v782 = vld [vmem:[%s777 + $0x20] sm:$0x1]
        %v783 = vld [vmem:[%s777 + $0x28] sm:$0x1]
        %v784 = vld [vmem:[%s777 + $0x30] sm:$0x1]
        %v785 = vld [vmem:[%s777 + $0x38] sm:$0x1]
        %v786 = vsub.f32 %v778, %v769
        %v787 = vsub.f32 %v779, %v770
        %v788 = vsub.f32 %v780, %v771
        %v789 = vsub.f32 %v781, %v772
        %v790 = vsub.f32 %v782, %v773
        %v791 = vsub.f32 %v783, %v774
        %v792 = vsub.f32 %v784, %v775
        %v793 = vsub.f32 %v785, %v776
        %v794 = vstv %s767
        %v795 = vmul.f32 %v794, %v786
        %v796 = vmul.f32 %v794, %v787
        %v797 = vmul.f32 %v794, %v788
        %v798 = vmul.f32 %v794, %v789
        %v799 = vmul.f32 %v794, %v790
        %v800 = vmul.f32 %v794, %v791
        %v801 = vmul.f32 %v794, %v792
        %v802 = vmul.f32 %v794, %v793
        %v803 = vadd.f32 %v769, %v795
        %v804 = vadd.f32 %v770, %v796
        %v805 = vadd.f32 %v771, %v797
        %v806 = vadd.f32 %v772, %v798
        %v807 = vadd.f32 %v773, %v799
        %v808 = vadd.f32 %v774, %v800
        %v809 = vadd.f32 %v775, %v801
        %v810 = vadd.f32 %v776, %v802
        %v819 = vrot.slane %v804, 7
        %v820 = vsel %vm519, %v819, %v803
        %v821 = vrot.slane %v805, 6
        %v822 = vsel %vm522, %v821, %v820
        %v823 = vrot.slane %v806, 5
        %v824 = vsel %vm525, %v823, %v822
        %v825 = vrot.slane %v807, 4
        %v826 = vsel %vm528, %v825, %v824
        %v827 = vrot.slane %v808, 3
        %v828 = vsel %vm531, %v827, %v826
        %v829 = vrot.slane %v809, 2
        %v830 = vsel %vm534, %v829, %v828
        %v831 = vrot.slane %v810, 1
        %v832 = vsel %vm537, %v831, %v830
        %833 = vrot.lane.b32.xlu0 %v832, 32
        %v834 = vpop.permute.xlu0 %833
        %vm836 = vcmask 326912
        %837 = vst.msk [vmem:[#allocation2] sm:$0xff] %vm836, %v834
        %s838 = sadd.s32 %s404, 5
        %s839 = sld [smem:[#allocation4 + %s838]]
        %s840 = sld [smem:[#allocation5 + %s838]]
        %s841 = sld [smem:[#allocation6 + %s838]]
        %s842 = scalar_lea.vmem %s394, %s839
        %v843 = vld [vmem:[%s842] sm:$0x1]
        %v844 = vld [vmem:[%s842 + $0x8] sm:$0x1]
        %v845 = vld [vmem:[%s842 + $0x10] sm:$0x1]
        %v846 = vld [vmem:[%s842 + $0x18] sm:$0x1]
        %v847 = vld [vmem:[%s842 + $0x20] sm:$0x1]
        %v848 = vld [vmem:[%s842 + $0x28] sm:$0x1]
        %v849 = vld [vmem:[%s842 + $0x30] sm:$0x1]
        %v850 = vld [vmem:[%s842 + $0x38] sm:$0x1]
        %s851 = scalar_lea.vmem %s394, %s840
        %v852 = vld [vmem:[%s851] sm:$0x1]
        %v853 = vld [vmem:[%s851 + $0x8] sm:$0x1]
        %v854 = vld [vmem:[%s851 + $0x10] sm:$0x1]
        %v855 = vld [vmem:[%s851 + $0x18] sm:$0x1]
        %v856 = vld [vmem:[%s851 + $0x20] sm:$0x1]
        %v857 = vld [vmem:[%s851 + $0x28] sm:$0x1]
        %v858 = vld [vmem:[%s851 + $0x30] sm:$0x1]
        %v859 = vld [vmem:[%s851 + $0x38] sm:$0x1]
        %v860 = vsub.f32 %v852, %v843
        %v861 = vsub.f32 %v853, %v844
        %v862 = vsub.f32 %v854, %v845
        %v863 = vsub.f32 %v855, %v846
        %v864 = vsub.f32 %v856, %v847
        %v865 = vsub.f32 %v857, %v848
        %v866 = vsub.f32 %v858, %v849
        %v867 = vsub.f32 %v859, %v850
        %v868 = vstv %s841
        %v869 = vmul.f32 %v868, %v860
        %v870 = vmul.f32 %v868, %v861
        %v871 = vmul.f32 %v868, %v862
        %v872 = vmul.f32 %v868, %v863
        %v873 = vmul.f32 %v868, %v864
        %v874 = vmul.f32 %v868, %v865
        %v875 = vmul.f32 %v868, %v866
        %v876 = vmul.f32 %v868, %v867
        %v877 = vadd.f32 %v843, %v869
        %v878 = vadd.f32 %v844, %v870
        %v879 = vadd.f32 %v845, %v871
        %v880 = vadd.f32 %v846, %v872
        %v881 = vadd.f32 %v847, %v873
        %v882 = vadd.f32 %v848, %v874
        %v883 = vadd.f32 %v849, %v875
        %v884 = vadd.f32 %v850, %v876
        %v893 = vrot.slane %v878, 7
        %v894 = vsel %vm519, %v893, %v877
        %v895 = vrot.slane %v879, 6
        %v896 = vsel %vm522, %v895, %v894
        %v897 = vrot.slane %v880, 5
        %v898 = vsel %vm525, %v897, %v896
        %v899 = vrot.slane %v881, 4
        %v900 = vsel %vm528, %v899, %v898
        %v901 = vrot.slane %v882, 3
        %v902 = vsel %vm531, %v901, %v900
        %v903 = vrot.slane %v883, 2
        %v904 = vsel %vm534, %v903, %v902
        %v905 = vrot.slane %v884, 1
        %v906 = vsel %vm537, %v905, %v904
        %907 = vrot.lane.b32.xlu0 %v906, 40
        %v908 = vpop.permute.xlu0 %907
        %vm910 = vcmask 392512
        %911 = vst.msk [vmem:[#allocation2] sm:$0xff] %vm910, %v908
        %s912 = sadd.s32 %s404, 6
        %s913 = sld [smem:[#allocation4 + %s912]]
        %s914 = sld [smem:[#allocation5 + %s912]]
        %s915 = sld [smem:[#allocation6 + %s912]]
        %s916 = scalar_lea.vmem %s394, %s913
        %v917 = vld [vmem:[%s916] sm:$0x1]
        %v918 = vld [vmem:[%s916 + $0x8] sm:$0x1]
        %v919 = vld [vmem:[%s916 + $0x10] sm:$0x1]
        %v920 = vld [vmem:[%s916 + $0x18] sm:$0x1]
        %v921 = vld [vmem:[%s916 + $0x20] sm:$0x1]
        %v922 = vld [vmem:[%s916 + $0x28] sm:$0x1]
        %v923 = vld [vmem:[%s916 + $0x30] sm:$0x1]
        %v924 = vld [vmem:[%s916 + $0x38] sm:$0x1]
        %s925 = scalar_lea.vmem %s394, %s914
        %v926 = vld [vmem:[%s925] sm:$0x1]
        %v927 = vld [vmem:[%s925 + $0x8] sm:$0x1]
        %v928 = vld [vmem:[%s925 + $0x10] sm:$0x1]
        %v929 = vld [vmem:[%s925 + $0x18] sm:$0x1]
        %v930 = vld [vmem:[%s925 + $0x20] sm:$0x1]
        %v931 = vld [vmem:[%s925 + $0x28] sm:$0x1]
        %v932 = vld [vmem:[%s925 + $0x30] sm:$0x1]
        %v933 = vld [vmem:[%s925 + $0x38] sm:$0x1]
        %v934 = vsub.f32 %v926, %v917
        %v935 = vsub.f32 %v927, %v918
        %v936 = vsub.f32 %v928, %v919
        %v937 = vsub.f32 %v929, %v920
        %v938 = vsub.f32 %v930, %v921
        %v939 = vsub.f32 %v931, %v922
        %v940 = vsub.f32 %v932, %v923
        %v941 = vsub.f32 %v933, %v924
        %v942 = vstv %s915
        %v943 = vmul.f32 %v942, %v934
        %v944 = vmul.f32 %v942, %v935
        %v945 = vmul.f32 %v942, %v936
        %v946 = vmul.f32 %v942, %v937
        %v947 = vmul.f32 %v942, %v938
        %v948 = vmul.f32 %v942, %v939
        %v949 = vmul.f32 %v942, %v940
        %v950 = vmul.f32 %v942, %v941
        %v951 = vadd.f32 %v917, %v943
        %v952 = vadd.f32 %v918, %v944
        %v953 = vadd.f32 %v919, %v945
        %v954 = vadd.f32 %v920, %v946
        %v955 = vadd.f32 %v921, %v947
        %v956 = vadd.f32 %v922, %v948
        %v957 = vadd.f32 %v923, %v949
        %v958 = vadd.f32 %v924, %v950
        %v967 = vrot.slane %v952, 7
        %v968 = vsel %vm519, %v967, %v951
        %v969 = vrot.slane %v953, 6
        %v970 = vsel %vm522, %v969, %v968
        %v971 = vrot.slane %v954, 5
        %v972 = vsel %vm525, %v971, %v970
        %v973 = vrot.slane %v955, 4
        %v974 = vsel %vm528, %v973, %v972
        %v975 = vrot.slane %v956, 3
        %v976 = vsel %vm531, %v975, %v974
        %v977 = vrot.slane %v957, 2
        %v978 = vsel %vm534, %v977, %v976
        %v979 = vrot.slane %v958, 1
        %v980 = vsel %vm537, %v979, %v978
        %981 = vrot.lane.b32.xlu0 %v980, 48
        %v982 = vpop.permute.xlu0 %981
        %vm984 = vcmask 458112
        %985 = vst.msk [vmem:[#allocation2] sm:$0xff] %vm984, %v982
        %s986 = sadd.s32 %s404, 7
        %s987 = sld [smem:[#allocation4 + %s986]]
        %s988 = sld [smem:[#allocation5 + %s986]]
        %s989 = sld [smem:[#allocation6 + %s986]]
        %s990 = scalar_lea.vmem %s394, %s987
        %v991 = vld [vmem:[%s990] sm:$0x1]
        %v992 = vld [vmem:[%s990 + $0x8] sm:$0x1]
        %v993 = vld [vmem:[%s990 + $0x10] sm:$0x1]
        %v994 = vld [vmem:[%s990 + $0x18] sm:$0x1]
        %v995 = vld [vmem:[%s990 + $0x20] sm:$0x1]
        %v996 = vld [vmem:[%s990 + $0x28] sm:$0x1]
        %v997 = vld [vmem:[%s990 + $0x30] sm:$0x1]
        %v998 = vld [vmem:[%s990 + $0x38] sm:$0x1]
        %s999 = scalar_lea.vmem %s394, %s988
        %v1000 = vld [vmem:[%s999] sm:$0x1]
        %v1001 = vld [vmem:[%s999 + $0x8] sm:$0x1]
        %v1002 = vld [vmem:[%s999 + $0x10] sm:$0x1]
        %v1003 = vld [vmem:[%s999 + $0x18] sm:$0x1]
        %v1004 = vld [vmem:[%s999 + $0x20] sm:$0x1]
        %v1005 = vld [vmem:[%s999 + $0x28] sm:$0x1]
        %v1006 = vld [vmem:[%s999 + $0x30] sm:$0x1]
        %v1007 = vld [vmem:[%s999 + $0x38] sm:$0x1]
        %v1008 = vsub.f32 %v1000, %v991
        %v1009 = vsub.f32 %v1001, %v992
        %v1010 = vsub.f32 %v1002, %v993
        %v1011 = vsub.f32 %v1003, %v994
        %v1012 = vsub.f32 %v1004, %v995
        %v1013 = vsub.f32 %v1005, %v996
        %v1014 = vsub.f32 %v1006, %v997
        %v1015 = vsub.f32 %v1007, %v998
        %v1016 = vstv %s989
        %v1017 = vmul.f32 %v1016, %v1008
        %v1018 = vmul.f32 %v1016, %v1009
        %v1019 = vmul.f32 %v1016, %v1010
        %v1020 = vmul.f32 %v1016, %v1011
        %v1021 = vmul.f32 %v1016, %v1012
        %v1022 = vmul.f32 %v1016, %v1013
        %v1023 = vmul.f32 %v1016, %v1014
        %v1024 = vmul.f32 %v1016, %v1015
        %v1025 = vadd.f32 %v991, %v1017
        %v1026 = vadd.f32 %v992, %v1018
        %v1027 = vadd.f32 %v993, %v1019
        %v1028 = vadd.f32 %v994, %v1020
        %v1029 = vadd.f32 %v995, %v1021
        %v1030 = vadd.f32 %v996, %v1022
        %v1031 = vadd.f32 %v997, %v1023
        %v1032 = vadd.f32 %v998, %v1024
        %v1041 = vrot.slane %v1026, 7
        %v1042 = vsel %vm519, %v1041, %v1025
        %v1043 = vrot.slane %v1027, 6
        %v1044 = vsel %vm522, %v1043, %v1042
        %v1045 = vrot.slane %v1028, 5
        %v1046 = vsel %vm525, %v1045, %v1044
        %v1047 = vrot.slane %v1029, 4
        %v1048 = vsel %vm528, %v1047, %v1046
        %v1049 = vrot.slane %v1030, 3
        %v1050 = vsel %vm531, %v1049, %v1048
        %v1051 = vrot.slane %v1031, 2
        %v1052 = vsel %vm534, %v1051, %v1050
        %v1053 = vrot.slane %v1032, 1
        %v1054 = vsel %vm537, %v1053, %v1052
        %1055 = vrot.lane.b32.xlu0 %v1054, 56
        %v1056 = vpop.permute.xlu0 %1055
        %vm1058 = vcmask 523712
        %1059 = vst.msk [vmem:[#allocation2] sm:$0xff] %vm1058, %v1056
        %v1060 = vld [vmem:[#allocation2] sm:$0xff]
        %v1061 = vld [vmem:[#allocation9] sm:$0xff]
        %v1062 = vld [vmem:[#allocation9 + $0x8] sm:$0xff]
        %v1063 = vld [vmem:[#allocation9 + $0x10] sm:$0xff]
        %v1064 = vld [vmem:[#allocation9 + $0x18] sm:$0xff]
        %v1065 = vld [vmem:[#allocation9 + $0x20] sm:$0xff]
        %v1066 = vld [vmem:[#allocation9 + $0x28] sm:$0xff]
        %v1067 = vld [vmem:[#allocation9 + $0x30] sm:$0xff]
        %v1068 = vld [vmem:[#allocation9 + $0x38] sm:$0xff]
        %vm1069 = vcmask 523264
        %v1071 = vsel %vm1069, %v1060, 0
        %1073 = vmatpush.msra.mxu0 0.0
        %1074 = vmatpush.msra.mxu0 0.0
        %1075 = vmatpush.msra.mxu0 0.0
        %1076 = vmatpush.msra.mxu0 0.0
        %1077 = vmatpush.msra.mxu0 0.0
        %1078 = vmatpush.msra.mxu0 0.0
        %1079 = vmatpush.msra.mxu0 0.0
        %1080 = vmatpush.msra.mxu0 0.0
        %1081 = vmatpush.msra.mxu0 %v1068
        %1082 = vmatpush.msra.mxu0 %v1067
        %1083 = vmatpush.msra.mxu0 %v1066
        %1084 = vmatpush.msra.mxu0 %v1065
        %1085 = vmatpush.msra.mxu0 %v1064
        %1086 = vmatpush.msra.mxu0 %v1063
        %1087 = vmatpush.msra.mxu0 %v1062
        %1088 = vmatpush.msra.mxu0 %v1061
        %1089 = vmatmul.f32.gmra.mxu0 %v1071
        %v1090 = vpop.f32.mrf.mxu0
        %v1091 = vadd.f32 %v463, %v1090
        %1092 = vdwg.mxu0
        %1093 = vst [vmem:[%s402] sm:$0xff] %v1091
        %p1094 = scmp.lt.s32.totalorder %s40, 1
        %s1095 = scalar_select %p1094, %s40, 1
        %p1096 = scmp.lt.s32.totalorder %s41, 1
        %s1097 = scalar_select %p1096, %s41, 1
        %s1098 = smul.addr %s1095, 2
        %s1099 = sadd.s32 %s1097, %s1098
        %s1100 = smul.addr %s1099, 8
        %s1101 = scalar_lea.vmem %s10, %s1100
        // Predicated region
        $region61: #{upsample_forward.1} parent=51 // pred_check
          %p1102 = pneg %p248
        $region62: #{upsample_forward.1} parent=51 // pred_check_branch
          %1104 = sbr.rel (%p1102) target = $region64
        $region63: #{upsample_forward.1} parent=51 // pred_region
          _
        $region64: #{upsample_forward.1} parent=51 // pred_fallthru
          _
      $region52: #{upsample_forward.1} parent=5 // pred_fallthru
        _
      %p1105 = scmp.le.s32.totalorder 2, %s31
      // Predicated region
      $region65: #{upsample_forward.1} parent=5 // pred_check
        %p1106 = pneg %p1105
      $region66: #{upsample_forward.1} parent=5 // pred_check_branch
        %1108 = sbr.rel (%p1106) target = $region68
      $region67: #{upsample_forward.1} parent=5 // pred_region
        %s1109 = ssub.s32 %s31, 2
        // Predicated region
        $region69: #{upsample_forward.1} parent=67 // pred_check
          %p1110 = pneg %p254
        $region70: #{upsample_forward.1} parent=67 // pred_check_branch
          %1112 = sbr.rel (%p1110) target = $region72
        $region71: #{upsample_forward.1} parent=67 // pred_region
          %p1113 = scmp.lt.s32.totalorder %s42, 1
          %s1114 = scalar_select %p1113, %s42, 1
          %p1115 = scmp.lt.s32.totalorder %s43, 1
          %s1116 = scalar_select %p1115, %s43, 1
          %s1117 = smul.addr %s1114, 2
          %s1118 = sadd.s32 %s1116, %s1117
          %s1119 = smul.addr %s1118, 8
          %s1120 = scalar_lea.vmem %s10, %s1119
        $region72: #{upsample_forward.1} parent=67 // pred_fallthru
          _
      $region68: #{upsample_forward.1} parent=5 // pred_fallthru
        _
    $region6: #{upsample_forward.1} parent=1 // loop_footer
      %s35 = sadd.s32 1, %s31
    $region7: #{upsample_forward.1} parent=1 // loop_footer_branch
      %30 = sbr.rel target = $region3
    $region8: #{upsample_forward.1} parent=1 // loop_exit
      _
    %1121 = vsyncpa [#allocation7], 1
    %s1122 = scalar_lea.sflag [#allocation7], 1
    %1123 = vsyncpa %s1122, 1
    %1124 = vsyncpa [#allocation8], 1
    %s1125 = scalar_lea.sflag [#allocation8], 1
    %1126 = vsyncpa %s1125, 1

</llo_original>
